<compile_context>
chip_gen: v7x
topology: tpu7x:2x2x1
jax: 0.10.0
libtpu: 0.0.40
codegen_flags: <defaults>
</compile_context>

<pallas_src>
import math
import functools

import jax
import jax.numpy as jnp
from jax import lax
from jax.experimental import pallas as pl
from jax.experimental.pallas import tpu as pltpu


# --------------------------------------------------------------------------
# Kernel 1: fused Q/K/V projection on [block_m, D] row tiles.
# --------------------------------------------------------------------------
def _qkv_proj_kernel(x_ref, wq_ref, wk_ref, wv_ref, bq_ref, bk_ref, bv_ref,
                     q_ref, k_ref, v_ref):
    x = x_ref[...]                       # native dtype straight into the MXU

    def proj(w_ref, b_ref):
        acc = jnp.dot(x, w_ref[...], preferred_element_type=jnp.float32)
        return acc + b_ref[...].astype(jnp.float32)

    q_ref[...] = proj(wq_ref, bq_ref).astype(q_ref.dtype)
    k_ref[...] = proj(wk_ref, bk_ref).astype(k_ref.dtype)
    v_ref[...] = proj(wv_ref, bv_ref).astype(v_ref.dtype)


# --------------------------------------------------------------------------
# Kernel 2: flash-attention style scaled-dot-product attention per head.
#   q/k/v blocks: (1, tq|tkv, dH); mask block: (1, 1, tkv)
#   grid = (B*nH, n_q_tiles, n_kv_tiles), kv innermost ("arbitrary").
# --------------------------------------------------------------------------
def _flash_attn_kernel(q_ref, k_ref, v_ref, mask_ref, o_ref,
                       m_sc, l_sc, acc_sc, *, scale):
    ki = pl.program_id(2)

    @pl.when(ki == 0)
    def _init():
        m_sc[...] = jnp.full(m_sc.shape, -jnp.inf, dtype=jnp.float32)
        l_sc[...] = jnp.zeros(l_sc.shape, dtype=jnp.float32)
        acc_sc[...] = jnp.zeros(acc_sc.shape, dtype=jnp.float32)

    q = q_ref[0]                         # (tq, dH)
    k = k_ref[0]                         # (tkv, dH)
    v = v_ref[0]                         # (tkv, dH)

    # scores (tq, tkv): contract over dH without materializing k^T.
    s = lax.dot_general(q, k, dimension_numbers=(((1,), (1,)), ((), ())),
                        preferred_element_type=jnp.float32)
    s = s * scale + mask_ref[0].astype(jnp.float32)   # (1, tkv) broadcasts

    m_prev = m_sc[...]
    m_new = jnp.maximum(m_prev, jnp.max(s, axis=-1, keepdims=True))
    alpha = jnp.exp(m_prev - m_new)                    # EUP; first step -> 0
    p = jnp.exp(s - m_new)
    l_sc[...] = alpha * l_sc[...] + jnp.sum(p, axis=-1, keepdims=True)
    acc_sc[...] = alpha * acc_sc[...] + jnp.dot(
        p.astype(v.dtype), v, preferred_element_type=jnp.float32)
    m_sc[...] = m_new

    # TODO(synk): attention-probs dropout omitted (eval-mode identity); a
    # training-mode version would Bernoulli-mask `p` here via pltpu.prng_*.

    @pl.when(ki == pl.num_programs(2) - 1)
    def _finalize():
        o_ref[0] = (acc_sc[...] / l_sc[...]).astype(o_ref.dtype)


# --------------------------------------------------------------------------
# Wrapper
# --------------------------------------------------------------------------
def _pad_axis(x, multiple, axis, value=0.0):
    size = x.shape[axis]
    pad = (-size) % multiple
    if pad == 0:
        return x
    widths = [(0, 0)] * x.ndim
    widths[axis] = (0, pad)
    return jnp.pad(x, widths, constant_values=value)


def bert_last_self_attention(hidden_states, attention_mask, params, *,
                             num_attention_heads,
                             block_m=256, block_q=128, block_kv=128,
                             vmem_limit_bytes=64 * 1024 * 1024):
    """hidden_states: [B, S, 2*hidden]; attention_mask: additive mask with
    B*S elements (e.g. [B, 1, 1, S] BERT extended mask or [B, S])."""
    B, S, D = hidden_states.shape
    A = params["wq"].shape[1]            # all_head_size (== D for this module)
    nH = num_attention_heads
    assert A % nH == 0
    dH = A // nH
    scale = 1.0 / math.sqrt(dH)
    out_dtype = hidden_states.dtype

    # ---------------- QKV projection ----------------
    M = B * S
    bm = block_m if M >= block_m else M
    x2d = _pad_axis(hidden_states.reshape(M, D), bm, axis=0)
    Mp = x2d.shape[0]

    q2d, k2d, v2d = pl.pallas_call(
        _qkv_proj_kernel,
        out_shape=(jax.ShapeDtypeStruct((Mp, A), out_dtype),
                   jax.ShapeDtypeStruct((Mp, A), out_dtype),
                   jax.ShapeDtypeStruct((Mp, A), out_dtype)),
        grid_spec=pltpu.PrefetchScalarGridSpec(
            num_scalar_prefetch=0,
            grid=(Mp // bm,),
            in_specs=[
                pl.BlockSpec((bm, D), lambda i: (i, 0)),
                pl.BlockSpec((D, A), lambda i: (0, 0)),
                pl.BlockSpec((D, A), lambda i: (0, 0)),
                pl.BlockSpec((D, A), lambda i: (0, 0)),
                pl.BlockSpec((1, A), lambda i: (0, 0)),
                pl.BlockSpec((1, A), lambda i: (0, 0)),
                pl.BlockSpec((1, A), lambda i: (0, 0)),
            ],
            out_specs=[
                pl.BlockSpec((bm, A), lambda i: (i, 0)),
                pl.BlockSpec((bm, A), lambda i: (i, 0)),
                pl.BlockSpec((bm, A), lambda i: (i, 0)),
            ],
        ),
        compiler_params=pltpu.CompilerParams(
            dimension_semantics=("parallel",),
            vmem_limit_bytes=vmem_limit_bytes),
        cost_estimate=pl.CostEstimate(
            flops=3 * 2 * Mp * D * A,
            transcendentals=0,
            bytes_accessed=4 * (Mp * D + 3 * D * A + 3 * A + 3 * Mp * A)),
    )(x2d, params["wq"], params["wk"], params["wv"],
      params["bq"], params["bk"], params["bv"])

    # ---------------- split heads: [Mp, A] -> [B*nH, S, dH] ----------------
    def to_heads(t2d):
        return (t2d[:M].reshape(B, S, nH, dH)
                       .transpose(0, 2, 1, 3)
                       .reshape(B * nH, S, dH))

    q3, k3, v3 = to_heads(q2d), to_heads(k2d), to_heads(v2d)

    # additive mask broadcast over heads -> [B*nH, 1, S]
    mask2 = attention_mask.reshape(B, S).astype(jnp.float32)
    mask_bh = jnp.broadcast_to(mask2[:, None, None, :],
                               (B, nH, 1, S)).reshape(B * nH, 1, S)

    tq = block_q if S >= block_q else S
    tkv = block_kv if S >= block_kv else S
    q3 = _pad_axis(q3, tq, axis=1)
    k3 = _pad_axis(k3, tkv, axis=1)
    v3 = _pad_axis(v3, tkv, axis=1)
    mask_bh = _pad_axis(mask_bh, tkv, axis=2, value=-1e30)
    Sq, Skv = q3.shape[1], k3.shape[1]

    BH = B * nH
    n_q, n_kv = Sq // tq, Skv // tkv

    attn_kernel = functools.partial(_flash_attn_kernel, scale=scale)

    ctx3 = pl.pallas_call(
        attn_kernel,
        out_shape=jax.ShapeDtypeStruct((BH, Sq, dH), out_dtype),
        grid_spec=pltpu.PrefetchScalarGridSpec(
            num_scalar_prefetch=0,
            grid=(BH, n_q, n_kv),
            in_specs=[
                pl.BlockSpec((1, tq, dH), lambda bh, qi, ki: (bh, qi, 0)),
                pl.BlockSpec((1, tkv, dH), lambda bh, qi, ki: (bh, ki, 0)),
                pl.BlockSpec((1, tkv, dH), lambda bh, qi, ki: (bh, ki, 0)),
                pl.BlockSpec((1, 1, tkv), lambda bh, qi, ki: (bh, 0, ki)),
            ],
            out_specs=pl.BlockSpec((1, tq, dH), lambda bh, qi, ki: (bh, qi, 0)),
            scratch_shapes=[
                pltpu.VMEM((tq, 1), jnp.float32),    # running max
                pltpu.VMEM((tq, 1), jnp.float32),    # running denominator
                pltpu.VMEM((tq, dH), jnp.float32),   # running numerator
            ],
        ),
        compiler_params=pltpu.CompilerParams(
            dimension_semantics=("parallel", "parallel", "arbitrary"),
            vmem_limit_bytes=vmem_limit_bytes),
        cost_estimate=pl.CostEstimate(
            flops=4 * BH * Sq * Skv * dH,
            transcendentals=BH * Sq * Skv,
            bytes_accessed=4 * (3 * BH * Skv * dH + BH * Sq * dH + BH * Skv)),
    )(q3, k3, v3, mask_bh)

    # merge heads: [B*nH, Sq, dH] -> [B, S, all_head_size]
    ctx = (ctx3[:, :S, :].reshape(B, nH, S, dH)
                         .transpose(0, 2, 1, 3)
                         .reshape(B, S, A))
    return ctx


# --------------------------------------------------------------------------
# Pure-JAX reference (same forward semantics) for a correctness check.
# --------------------------------------------------------------------------
def _reference(hidden_states, attention_mask, params, num_heads):
    B, S, D = hidden_states.shape
    A = params["wq"].shape[1]
    dH = A // num_heads
    x = hidden_states.astype(jnp.float32)
    q = x @ params["wq"] + params["bq"]
    k = x @ params["wk"] + params["bk"]
    v = x @ params["wv"] + params["bv"]

    def split(t):
        return t.reshape(B, S, num_heads, dH).transpose(0, 2, 1, 3)

    q, k, v = split(q), split(k), split(v)
    scores = jnp.einsum("bhqd,bhkd->bhqk", q, k) / math.sqrt(dH)
    scores = scores + attention_mask.reshape(B, 1, 1, S).astype(jnp.float32)
    probs = jax.nn.softmax(scores, axis=-1)
    ctx = jnp.einsum("bhqk,bhkd->bhqd", probs, v)
    return ctx.transpose(0, 2, 1, 3).reshape(B, S, A)


if __name__ == "__main__":
    # Small config consistent with the module: hidden_size=16 -> input dim 32,
    # num_attention_heads=4 -> head_size = int(16*2/4) = 8, all_head_size = 32.
    B, S = 2, 8
    hidden_size, num_heads = 16, 4
    D = 2 * hidden_size
    dH = (2 * hidden_size) // num_heads
    A = num_heads * dH

    key = jax.random.PRNGKey(0)
    kx, kwq, kwk, kwv, kbq, kbk, kbv = jax.random.split(key, 7)

    hidden_states = jax.random.normal(kx, (B, S, D), dtype=jnp.float32)

    # BERT-style additive mask [B, 1, 1, S]; mask out the last 2 kv positions
    # of the second batch element.
    attention_mask = jnp.zeros((B, 1, 1, S), dtype=jnp.float32)
    attention_mask = attention_mask.at[1, :, :, S - 2:].set(-10000.0)

    params = {
        # nn.Linear weights stored pre-transposed as [in, out] = [D, A]
        "wq": 0.1 * jax.random.normal(kwq, (D, A), dtype=jnp.float32),
        "wk": 0.1 * jax.random.normal(kwk, (D, A), dtype=jnp.float32),
        "wv": 0.1 * jax.random.normal(kwv, (D, A), dtype=jnp.float32),
        "bq": 0.01 * jax.random.normal(kbq, (1, A), dtype=jnp.float32),
        "bk": 0.01 * jax.random.normal(kbk, (1, A), dtype=jnp.float32),
        "bv": 0.01 * jax.random.normal(kbv, (1, A), dtype=jnp.float32),
    }

    fn = jax.jit(functools.partial(bert_last_self_attention,
                                   num_attention_heads=num_heads))
    ctx = fn(hidden_states, attention_mask, params)
    ctx = jax.block_until_ready(ctx)

    ref = _reference(hidden_states, attention_mask, params, num_heads)
    assert ctx.shape == (B, S, A), ctx.shape
    err = float(jnp.max(jnp.abs(ctx - ref)))
    assert jnp.allclose(ctx, ref, atol=1e-4, rtol=1e-4), f"mismatch vs reference: {err}"

    print("KERNEL_OK")
</pallas_src>

<mosaic_0001>
module attributes {stable_mosaic.version = 11 : i64} {
  func.func @_qkv_proj_kernel(%arg0: i32, %arg1: memref<16x32xf32, #tpu.memory_space<vmem>>, %arg2: memref<32x32xf32, #tpu.memory_space<vmem>>, %arg3: memref<32x32xf32, #tpu.memory_space<vmem>>, %arg4: memref<32x32xf32, #tpu.memory_space<vmem>>, %arg5: memref<1x32xf32, #tpu.memory_space<vmem>>, %arg6: memref<1x32xf32, #tpu.memory_space<vmem>>, %arg7: memref<1x32xf32, #tpu.memory_space<vmem>>, %arg8: memref<16x32xf32, #tpu.memory_space<vmem>>, %arg9: memref<16x32xf32, #tpu.memory_space<vmem>>, %arg10: memref<16x32xf32, #tpu.memory_space<vmem>>) attributes {dimension_semantics = [#tpu.dimension_semantics<parallel>], iteration_bounds = array<i64: 1>, scalar_prefetch = 0 : i64, scratch_operands = 0 : i64, tpu.core_type = #tpu.core_type<tc>, window_params = [{transform_indices = @transform_0, window_bounds = array<i64: 16, 32>}, {pipeline_mode = #tpu.pipeline_mode<synchronous>, transform_indices = @transform_1, window_bounds = array<i64: 32, 32>}, {pipeline_mode = #tpu.pipeline_mode<synchronous>, transform_indices = @transform_2, window_bounds = array<i64: 32, 32>}, {pipeline_mode = #tpu.pipeline_mode<synchronous>, transform_indices = @transform_3, window_bounds = array<i64: 32, 32>}, {pipeline_mode = #tpu.pipeline_mode<synchronous>, transform_indices = @transform_4, window_bounds = array<i64: 1, 32>}, {pipeline_mode = #tpu.pipeline_mode<synchronous>, transform_indices = @transform_5, window_bounds = array<i64: 1, 32>}, {pipeline_mode = #tpu.pipeline_mode<synchronous>, transform_indices = @transform_6, window_bounds = array<i64: 1, 32>}, {transform_indices = @transform_7, window_bounds = array<i64: 16, 32>}, {transform_indices = @transform_8, window_bounds = array<i64: 16, 32>}, {transform_indices = @transform_9, window_bounds = array<i64: 16, 32>}]} {
    %c0 = arith.constant 0 : index
    %c0_0 = arith.constant 0 : index
    %0 = vector.load %arg1[%c0, %c0_0] : memref<16x32xf32, #tpu.memory_space<vmem>>, vector<16x32xf32>
    %c0_1 = arith.constant 0 : index
    %c0_2 = arith.constant 0 : index
    %1 = vector.load %arg2[%c0_1, %c0_2] : memref<32x32xf32, #tpu.memory_space<vmem>>, vector<32x32xf32>
    %cst = arith.constant dense<0.000000e+00> : vector<16x32xf32>
    %2 = tpu.matmul %0, %1, %cst {dimension_numbers = #tpu.dot_dimension_numbers<[1], [0], [0], [1], [0, 0, 1, 1], [], []>} : vector<16x32xf32>, vector<32x32xf32>, vector<16x32xf32> -> vector<16x32xf32>
    %c0_3 = arith.constant 0 : index
    %c0_4 = arith.constant 0 : index
    %3 = vector.load %arg5[%c0_3, %c0_4] : memref<1x32xf32, #tpu.memory_space<vmem>>, vector<1x32xf32>
    %4 = vector.broadcast %3 : vector<1x32xf32> to vector<16x32xf32>
    %5 = arith.addf %2, %4 : vector<16x32xf32>
    %c0_5 = arith.constant 0 : index
    %c0_6 = arith.constant 0 : index
    %6 = vector.load %arg8[%c0_5, %c0_6] : memref<16x32xf32, #tpu.memory_space<vmem>>, vector<16x32xf32>
    tpu.vector_store %arg8[%c0_5, %c0_6], %5 {strides = array<i32>} : memref<16x32xf32, #tpu.memory_space<vmem>>, vector<16x32xf32>,
    %c0_7 = arith.constant 0 : index
    %c0_8 = arith.constant 0 : index
    %7 = vector.load %arg3[%c0_7, %c0_8] : memref<32x32xf32, #tpu.memory_space<vmem>>, vector<32x32xf32>
    %cst_9 = arith.constant dense<0.000000e+00> : vector<16x32xf32>
    %8 = tpu.matmul %0, %7, %cst_9 {dimension_numbers = #tpu.dot_dimension_numbers<[1], [0], [0], [1], [0, 0, 1, 1], [], []>} : vector<16x32xf32>, vector<32x32xf32>, vector<16x32xf32> -> vector<16x32xf32>
    %c0_10 = arith.constant 0 : index
    %c0_11 = arith.constant 0 : index
    %9 = vector.load %arg6[%c0_10, %c0_11] : memref<1x32xf32, #tpu.memory_space<vmem>>, vector<1x32xf32>
    %10 = vector.broadcast %9 : vector<1x32xf32> to vector<16x32xf32>
    %11 = arith.addf %8, %10 : vector<16x32xf32>
    %c0_12 = arith.constant 0 : index
    %c0_13 = arith.constant 0 : index
    %12 = vector.load %arg9[%c0_12, %c0_13] : memref<16x32xf32, #tpu.memory_space<vmem>>, vector<16x32xf32>
    tpu.vector_store %arg9[%c0_12, %c0_13], %11 {strides = array<i32>} : memref<16x32xf32, #tpu.memory_space<vmem>>, vector<16x32xf32>,
    %c0_14 = arith.constant 0 : index
    %c0_15 = arith.constant 0 : index
    %13 = vector.load %arg4[%c0_14, %c0_15] : memref<32x32xf32, #tpu.memory_space<vmem>>, vector<32x32xf32>
    %cst_16 = arith.constant dense<0.000000e+00> : vector<16x32xf32>
    %14 = tpu.matmul %0, %13, %cst_16 {dimension_numbers = #tpu.dot_dimension_numbers<[1], [0], [0], [1], [0, 0, 1, 1], [], []>} : vector<16x32xf32>, vector<32x32xf32>, vector<16x32xf32> -> vector<16x32xf32>
    %c0_17 = arith.constant 0 : index
    %c0_18 = arith.constant 0 : index
    %15 = vector.load %arg7[%c0_17, %c0_18] : memref<1x32xf32, #tpu.memory_space<vmem>>, vector<1x32xf32>
    %16 = vector.broadcast %15 : vector<1x32xf32> to vector<16x32xf32>
    %17 = arith.addf %14, %16 : vector<16x32xf32>
    %c0_19 = arith.constant 0 : index
    %c0_20 = arith.constant 0 : index
    %18 = vector.load %arg10[%c0_19, %c0_20] : memref<16x32xf32, #tpu.memory_space<vmem>>, vector<16x32xf32>
    tpu.vector_store %arg10[%c0_19, %c0_20], %17 {strides = array<i32>} : memref<16x32xf32, #tpu.memory_space<vmem>>, vector<16x32xf32>,
    return
  }
  func.func @transform_0(%arg0: i32) -> (i32, i32) {
    %c0_i32 = arith.constant 0 : i32
    %c0_i32_0 = arith.constant 0 : i32
    return %arg0, %c0_i32 : i32, i32
  }
  func.func @transform_1(%arg0: i32) -> (i32, i32) {
    %c0_i32 = arith.constant 0 : i32
    %c0_i32_0 = arith.constant 0 : i32
    %c0_i32_1 = arith.constant 0 : i32
    return %c0_i32, %c0_i32_0 : i32, i32
  }
  func.func @transform_2(%arg0: i32) -> (i32, i32) {
    %c0_i32 = arith.constant 0 : i32
    %c0_i32_0 = arith.constant 0 : i32
    %c0_i32_1 = arith.constant 0 : i32
    return %c0_i32, %c0_i32_0 : i32, i32
  }
  func.func @transform_3(%arg0: i32) -> (i32, i32) {
    %c0_i32 = arith.constant 0 : i32
    %c0_i32_0 = arith.constant 0 : i32
    %c0_i32_1 = arith.constant 0 : i32
    return %c0_i32, %c0_i32_0 : i32, i32
  }
  func.func @transform_4(%arg0: i32) -> (i32, i32) {
    %c0_i32 = arith.constant 0 : i32
    %c0_i32_0 = arith.constant 0 : i32
    %c0_i32_1 = arith.constant 0 : i32
    return %c0_i32, %c0_i32_0 : i32, i32
  }
  func.func @transform_5(%arg0: i32) -> (i32, i32) {
    %c0_i32 = arith.constant 0 : i32
    %c0_i32_0 = arith.constant 0 : i32
    %c0_i32_1 = arith.constant 0 : i32
    return %c0_i32, %c0_i32_0 : i32, i32
  }
  func.func @transform_6(%arg0: i32) -> (i32, i32) {
    %c0_i32 = arith.constant 0 : i32
    %c0_i32_0 = arith.constant 0 : i32
    %c0_i32_1 = arith.constant 0 : i32
    return %c0_i32, %c0_i32_0 : i32, i32
  }
  func.func @transform_7(%arg0: i32) -> (i32, i32) {
    %c0_i32 = arith.constant 0 : i32
    %c0_i32_0 = arith.constant 0 : i32
    return %arg0, %c0_i32 : i32, i32
  }
  func.func @transform_8(%arg0: i32) -> (i32, i32) {
    %c0_i32 = arith.constant 0 : i32
    %c0_i32_0 = arith.constant 0 : i32
    return %arg0, %c0_i32 : i32, i32
  }
  func.func @transform_9(%arg0: i32) -> (i32, i32) {
    %c0_i32 = arith.constant 0 : i32
    %c0_i32_0 = arith.constant 0 : i32
    return %arg0, %c0_i32 : i32, i32
  }
}

module attributes {stable_mosaic.version = 11 : i64} {
  func.func @_flash_attn_kernel(%arg0: i32, %arg1: i32, %arg2: i32, %arg3: memref<1x8x8xf32, #tpu.memory_space<vmem>>, %arg4: memref<1x8x8xf32, #tpu.memory_space<vmem>>, %arg5: memref<1x8x8xf32, #tpu.memory_space<vmem>>, %arg6: memref<1x1x8xf32, #tpu.memory_space<vmem>>, %arg7: memref<1x8x8xf32, #tpu.memory_space<vmem>>, %arg8: memref<8x1xf32, #tpu.memory_space<vmem>>, %arg9: memref<8x1xf32, #tpu.memory_space<vmem>>, %arg10: memref<8x8xf32, #tpu.memory_space<vmem>>) attributes {dimension_semantics = [#tpu.dimension_semantics<parallel>, #tpu.dimension_semantics<parallel>, #tpu.dimension_semantics<arbitrary>], iteration_bounds = array<i64: 8, 1, 1>, scalar_prefetch = 0 : i64, scratch_operands = 3 : i64, tpu.core_type = #tpu.core_type<tc>, window_params = [{transform_indices = @transform_0, window_bounds = array<i64: 1, 8, 8>}, {transform_indices = @transform_1, window_bounds = array<i64: 1, 8, 8>}, {transform_indices = @transform_2, window_bounds = array<i64: 1, 8, 8>}, {transform_indices = @transform_3, window_bounds = array<i64: 1, 1, 8>}, {transform_indices = @transform_4, window_bounds = array<i64: 1, 8, 8>}]} {
    %c0_i32 = arith.constant 0 : i32
    %0 = arith.cmpi eq, %arg2, %c0_i32 : i32
    %1 = arith.extui %0 : i1 to i32
    %c0_i32_0 = arith.constant 0 : i32
    %2 = arith.cmpi ne, %1, %c0_i32_0 : i32
    scf.if %2 {
      %cst_30 = arith.constant 0xFF800000 : f32
      %41 = vector.broadcast %cst_30 : f32 to vector<8x1xf32>
      %c0_31 = arith.constant 0 : index
      %c0_32 = arith.constant 0 : index
      %42 = vector.load %arg8[%c0_31, %c0_32] : memref<8x1xf32, #tpu.memory_space<vmem>>, vector<8x1xf32>
      tpu.vector_store %arg8[%c0_31, %c0_32], %41 {strides = array<i32>} : memref<8x1xf32, #tpu.memory_space<vmem>>, vector<8x1xf32>,
      %cst_33 = arith.constant 0.000000e+00 : f32
      %43 = vector.broadcast %cst_33 : f32 to vector<8x1xf32>
      %c0_34 = arith.constant 0 : index
      %c0_35 = arith.constant 0 : index
      %44 = vector.load %arg9[%c0_34, %c0_35] : memref<8x1xf32, #tpu.memory_space<vmem>>, vector<8x1xf32>
      tpu.vector_store %arg9[%c0_34, %c0_35], %43 {strides = array<i32>} : memref<8x1xf32, #tpu.memory_space<vmem>>, vector<8x1xf32>,
      %cst_36 = arith.constant 0.000000e+00 : f32
      %45 = vector.broadcast %cst_36 : f32 to vector<8x8xf32>
      %c0_37 = arith.constant 0 : index
      %c0_38 = arith.constant 0 : index
      %46 = vector.load %arg10[%c0_37, %c0_38] : memref<8x8xf32, #tpu.memory_space<vmem>>, vector<8x8xf32>
      tpu.vector_store %arg10[%c0_37, %c0_38], %45 {strides = array<i32>} : memref<8x8xf32, #tpu.memory_space<vmem>>, vector<8x8xf32>,
    } else {
    }
    %c0 = arith.constant 0 : index
    %c0_1 = arith.constant 0 : index
    %c0_2 = arith.constant 0 : index
    %3 = vector.load %arg3[%c0, %c0_1, %c0_2] : memref<1x8x8xf32, #tpu.memory_space<vmem>>, vector<1x8x8xf32>
    %4 = vector.shape_cast %3 : vector<1x8x8xf32> to vector<8x8xf32>
    %c0_3 = arith.constant 0 : index
    %c0_4 = arith.constant 0 : index
    %c0_5 = arith.constant 0 : index
    %5 = vector.load %arg4[%c0_3, %c0_4, %c0_5] : memref<1x8x8xf32, #tpu.memory_space<vmem>>, vector<1x8x8xf32>
    %6 = vector.shape_cast %5 : vector<1x8x8xf32> to vector<8x8xf32>
    %c0_6 = arith.constant 0 : index
    %c0_7 = arith.constant 0 : index
    %c0_8 = arith.constant 0 : index
    %7 = vector.load %arg5[%c0_6, %c0_7, %c0_8] : memref<1x8x8xf32, #tpu.memory_space<vmem>>, vector<1x8x8xf32>
    %8 = vector.shape_cast %7 : vector<1x8x8xf32> to vector<8x8xf32>
    %cst = arith.constant dense<0.000000e+00> : vector<8x8xf32>
    %9 = tpu.matmul %4, %6, %cst {dimension_numbers = #tpu.dot_dimension_numbers<[1], [1], [0], [0], [0, 0, 1, 0], [], []>} : vector<8x8xf32>, vector<8x8xf32>, vector<8x8xf32> -> vector<8x8xf32>
    %cst_9 = arith.constant 0.353553385 : f32
    %10 = vector.broadcast %cst_9 : f32 to vector<8x8xf32>
    %11 = arith.mulf %9, %10 : vector<8x8xf32>
    %c0_10 = arith.constant 0 : index
    %c0_11 = arith.constant 0 : index
    %c0_12 = arith.constant 0 : index
    %12 = vector.load %arg6[%c0_10, %c0_11, %c0_12] : memref<1x1x8xf32, #tpu.memory_space<vmem>>, vector<1x1x8xf32>
    %13 = vector.shape_cast %12 : vector<1x1x8xf32> to vector<1x8xf32>
    %14 = vector.broadcast %13 : vector<1x8xf32> to vector<8x8xf32>
    %15 = arith.addf %11, %14 : vector<8x8xf32>
    %c0_13 = arith.constant 0 : index
    %c0_14 = arith.constant 0 : index
    %16 = vector.load %arg8[%c0_13, %c0_14] : memref<8x1xf32, #tpu.memory_space<vmem>>, vector<8x1xf32>
    %cst_15 = arith.constant dense<0xFF800000> : vector<8xf32>
    %17 = vector.multi_reduction <maximumf>, %15, %cst_15 [1] : vector<8x8xf32> to vector<8xf32>
    %18 = vector.shape_cast %17 : vector<8xf32> to vector<8x1xf32>
    %19 = arith.maximumf %16, %18 : vector<8x1xf32>
    %20 = arith.subf %16, %19 : vector<8x1xf32>
    %21 = math.exp %20 : vector<8x1xf32>
    %22 = vector.broadcast %19 : vector<8x1xf32> to vector<8x8xf32>
    %23 = arith.subf %15, %22 : vector<8x8xf32>
    %24 = math.exp %23 : vector<8x8xf32>
    %c0_16 = arith.constant 0 : index
    %c0_17 = arith.constant 0 : index
    %25 = vector.load %arg9[%c0_16, %c0_17] : memref<8x1xf32, #tpu.memory_space<vmem>>, vector<8x1xf32>
    %26 = arith.mulf %21, %25 : vector<8x1xf32>
    %cst_18 = arith.constant dense<0.000000e+00> : vector<8xf32>
    %27 = vector.multi_reduction <add>, %24, %cst_18 [1] : vector<8x8xf32> to vector<8xf32>
    %28 = vector.shape_cast %27 : vector<8xf32> to vector<8x1xf32>
    %29 = arith.addf %26, %28 : vector<8x1xf32>
    %c0_19 = arith.constant 0 : index
    %c0_20 = arith.constant 0 : index
    %30 = vector.load %arg9[%c0_19, %c0_20] : memref<8x1xf32, #tpu.memory_space<vmem>>, vector<8x1xf32>
    tpu.vector_store %arg9[%c0_19, %c0_20], %29 {strides = array<i32>} : memref<8x1xf32, #tpu.memory_space<vmem>>, vector<8x1xf32>,
    %c0_21 = arith.constant 0 : index
    %c0_22 = arith.constant 0 : index
    %31 = vector.load %arg10[%c0_21, %c0_22] : memref<8x8xf32, #tpu.memory_space<vmem>>, vector<8x8xf32>
    %32 = vector.broadcast %21 : vector<8x1xf32> to vector<8x8xf32>
    %33 = arith.mulf %32, %31 : vector<8x8xf32>
    %cst_23 = arith.constant dense<0.000000e+00> : vector<8x8xf32>
    %34 = tpu.matmul %24, %8, %cst_23 {dimension_numbers = #tpu.dot_dimension_numbers<[1], [0], [0], [1], [0, 0, 1, 1], [], []>} : vector<8x8xf32>, vector<8x8xf32>, vector<8x8xf32> -> vector<8x8xf32>
    %35 = arith.addf %33, %34 : vector<8x8xf32>
    %c0_24 = arith.constant 0 : index
    %c0_25 = arith.constant 0 : index
    %36 = vector.load %arg10[%c0_24, %c0_25] : memref<8x8xf32, #tpu.memory_space<vmem>>, vector<8x8xf32>
    tpu.vector_store %arg10[%c0_24, %c0_25], %35 {strides = array<i32>} : memref<8x8xf32, #tpu.memory_space<vmem>>, vector<8x8xf32>,
    %c0_26 = arith.constant 0 : index
    %c0_27 = arith.constant 0 : index
    %37 = vector.load %arg8[%c0_26, %c0_27] : memref<8x1xf32, #tpu.memory_space<vmem>>, vector<8x1xf32>
    tpu.vector_store %arg8[%c0_26, %c0_27], %19 {strides = array<i32>} : memref<8x1xf32, #tpu.memory_space<vmem>>, vector<8x1xf32>,
    %c0_i32_28 = arith.constant 0 : i32
    %38 = arith.cmpi eq, %arg2, %c0_i32_28 : i32
    %39 = arith.extui %38 : i1 to i32
    %c0_i32_29 = arith.constant 0 : i32
    %40 = arith.cmpi ne, %39, %c0_i32_29 : i32
    scf.if %40 {
      %c0_30 = arith.constant 0 : index
      %c0_31 = arith.constant 0 : index
      %41 = vector.load %arg10[%c0_30, %c0_31] : memref<8x8xf32, #tpu.memory_space<vmem>>, vector<8x8xf32>
      %c0_32 = arith.constant 0 : index
      %c0_33 = arith.constant 0 : index
      %42 = vector.load %arg9[%c0_32, %c0_33] : memref<8x1xf32, #tpu.memory_space<vmem>>, vector<8x1xf32>
      %43 = vector.broadcast %42 : vector<8x1xf32> to vector<8x8xf32>
      %44 = arith.divf %41, %43 : vector<8x8xf32>
      %c0_34 = arith.constant 0 : index
      %c0_35 = arith.constant 0 : index
      %c0_36 = arith.constant 0 : index
      %45 = vector.load %arg7[%c0_34, %c0_35, %c0_36] : memref<1x8x8xf32, #tpu.memory_space<vmem>>, vector<1x8x8xf32>
      %46 = vector.shape_cast %45 : vector<1x8x8xf32> to vector<8x8xf32>
      %47 = vector.shape_cast %44 : vector<8x8xf32> to vector<1x8x8xf32>
      tpu.vector_store %arg7[%c0_34, %c0_35, %c0_36], %47 {strides = array<i32>} : memref<1x8x8xf32, #tpu.memory_space<vmem>>, vector<1x8x8xf32>,
    } else {
    }
    return
  }
  func.func @transform_0(%arg0: i32, %arg1: i32, %arg2: i32) -> (i32, i32, i32) {
    %c0_i32 = arith.constant 0 : i32
    %c0_i32_0 = arith.constant 0 : i32
    return %arg0, %arg1, %c0_i32 : i32, i32, i32
  }
  func.func @transform_1(%arg0: i32, %arg1: i32, %arg2: i32) -> (i32, i32, i32) {
    %c0_i32 = arith.constant 0 : i32
    %c0_i32_0 = arith.constant 0 : i32
    return %arg0, %arg2, %c0_i32 : i32, i32, i32
  }
  func.func @transform_2(%arg0: i32, %arg1: i32, %arg2: i32) -> (i32, i32, i32) {
    %c0_i32 = arith.constant 0 : i32
    %c0_i32_0 = arith.constant 0 : i32
    return %arg0, %arg2, %c0_i32 : i32, i32, i32
  }
  func.func @transform_3(%arg0: i32, %arg1: i32, %arg2: i32) -> (i32, i32, i32) {
    %c0_i32 = arith.constant 0 : i32
    %c0_i32_0 = arith.constant 0 : i32
    return %arg0, %c0_i32, %arg2 : i32, i32, i32
  }
  func.func @transform_4(%arg0: i32, %arg1: i32, %arg2: i32) -> (i32, i32, i32) {
    %c0_i32 = arith.constant 0 : i32
    %c0_i32_0 = arith.constant 0 : i32
    return %arg0, %arg1, %c0_i32 : i32, i32, i32
  }
}

</mosaic_0001>

<llo_original>
// kernel: bert_last_self_attention.2
$region0: #{bert_last_self_attention.2}
  #allocation0 [shape = 'u32[]', space=smem, size = 0x4, offset = 0x4, fixed_abs, tag = 'smem constant byte address 0x4 - core index']
  #allocation1 [shape = 'u32[144,128]{1,0:T(1,128)}', space=vmem, size = 0x12000, scoped, tag = 'internal scratch']
  %s0 = inlined_call_operand.hbm [shape: f32[16,32], index: 0, kind: input, shape index: {}]
  %s1 = inlined_call_operand.hbm [shape: f32[32,32], index: 1, kind: input, shape index: {}]
  %s2 = inlined_call_operand.hbm [shape: f32[32,32], index: 2, kind: input, shape index: {}]
  %s3 = inlined_call_operand.hbm [shape: f32[32,32], index: 3, kind: input, shape index: {}]
  %s4 = inlined_call_operand.hbm [shape: f32[1,32], index: 4, kind: input, shape index: {}]
  %s5 = inlined_call_operand.hbm [shape: f32[1,32], index: 5, kind: input, shape index: {}]
  %s6 = inlined_call_operand.hbm [shape: f32[1,32], index: 6, kind: input, shape index: {}]
  %s7 = inlined_call_operand.hbm [shape: f32[16,32], index: 7, kind: output, shape index: {0}]
  %s8 = inlined_call_operand.hbm [shape: f32[16,32], index: 8, kind: output, shape index: {1}]
  %s9 = inlined_call_operand.hbm [shape: f32[16,32], index: 9, kind: output, shape index: {2}]
  %10 = xla_tuple %s7, %s8, %s9
  %s11 = sld [smem:[#allocation0]]
  $region82: #{bert_last_self_attention.2} parent=0
    _
  %s13 = ssub.s32 1, %s11
  %s14 = scalar_select 0, %s13, %s11
  $region1: #{bert_last_self_attention.2} parent=0
    #allocation2 [shape = 'u8[8192]{0}', space=vmem, size = 0x2000, scoped, tag = 'input window, operand 0, single buffered']
    #allocation3 [shape = 's32[1]{0}', space=sflag, size = 0x4, scoped, tag = 'scoped memory for bert_last_self_attention.2']
    #allocation4 [shape = 's32[1]{0}', space=sflag, size = 0x4, scoped, tag = 'scoped memory for bert_last_self_attention.2']
    #allocation5 [shape = 'u8[16384]{0}', space=vmem, size = 0x4000, scoped, tag = 'input window, operand 1, single buffered']
    #allocation6 [shape = 's32[1]{0}', space=sflag, size = 0x4, scoped, tag = 'scoped memory for bert_last_self_attention.2']
    #allocation7 [shape = 'u8[16384]{0}', space=vmem, size = 0x4000, scoped, tag = 'input window, operand 2, single buffered']
    #allocation8 [shape = 'u8[16384]{0}', space=vmem, size = 0x4000, scoped, tag = 'input window, operand 3, single buffered']
    #allocation9 [shape = 's32[1]{0}', space=sflag, size = 0x4, scoped, tag = 'scoped memory for bert_last_self_attention.2']
    #allocation10 [shape = 'u8[512]{0}', space=vmem, size = 0x400, scoped, tag = 'input window, operand 4, single buffered']
    #allocation11 [shape = 'u8[512]{0}', space=vmem, size = 0x400, scoped, tag = 'input window, operand 5, single buffered']
    #allocation12 [shape = 's32[1]{0}', space=sflag, size = 0x4, scoped, tag = 'scoped memory for bert_last_self_attention.2']
    #allocation13 [shape = 'u8[512]{0}', space=vmem, size = 0x400, scoped, tag = 'input window, operand 6, single buffered']
    #allocation14 [shape = 'u8[8192]{0}', space=vmem, size = 0x2000, scoped, tag = 'output window, operand 0, single buffered']
    #allocation15 [shape = 'u8[8192]{0}', space=vmem, size = 0x2000, scoped, tag = 'output window, operand 1, single buffered']
    #allocation16 [shape = 's32[1]{0}', space=sflag, size = 0x4, scoped, tag = 'scoped memory for bert_last_self_attention.2']
    #allocation17 [shape = 'u8[8192]{0}', space=vmem, size = 0x2000, scoped, tag = 'output window, operand 2, single buffered']
    %15 = vsyncpa [#allocation3], 0
    %16 = vsyncpa [#allocation6], 0
    %17 = vsyncpa [#allocation9], 0
    %18 = vsyncpa [#allocation12], 0
    %19 = vsyncpa [#allocation4], 0
    %20 = vsyncpa [#allocation16], 0
    // Predicated region
    $region2: #{bert_last_self_attention.2} parent=1 // pred_check
      _
    $region3: #{bert_last_self_attention.2} parent=1 // pred_check_branch
      %22 = sbr.rel (0) target = $region5
    $region4: #{bert_last_self_attention.2} parent=1 // pred_region
      %s24 = ssub.s32 256, 256
      %25 = vsyncadd [#allocation3], %s24
      %s26 = sshll.u32 [#allocation2], 4
      %s27 = int_to_ptr.vmem [resolvable:$true] %s26
      %32 = dma.hbm_to_vmem [thread:$0]  %s0, 256, %s27, [#allocation3], 128, 128, 8
    $region5: #{bert_last_self_attention.2} parent=1 // pred_fallthru
      _
    // Predicated region
    $region6: #{bert_last_self_attention.2} parent=1 // pred_check
      _
    $region7: #{bert_last_self_attention.2} parent=1 // pred_check_branch
      %34 = sbr.rel (0) target = $region9
    $region8: #{bert_last_self_attention.2} parent=1 // pred_region
      %s36 = ssub.s32 512, 512
      %37 = vsyncadd [#allocation6], %s36
      %s38 = sshll.u32 [#allocation5], 4
      %s39 = int_to_ptr.vmem [resolvable:$true] %s38
      %44 = dma.hbm_to_vmem [thread:$0]  %s1, 512, %s39, [#allocation6], 128, 128, 8
    $region9: #{bert_last_self_attention.2} parent=1 // pred_fallthru
      _
    // Predicated region
    $region10: #{bert_last_self_attention.2} parent=1 // pred_check
      _
    $region11: #{bert_last_self_attention.2} parent=1 // pred_check_branch
      %46 = sbr.rel (0) target = $region13
    $region12: #{bert_last_self_attention.2} parent=1 // pred_region
      %s48 = ssub.s32 512, 512
      %49 = vsyncadd [#allocation6], %s48
      %s50 = sshll.u32 [#allocation7], 4
      %s51 = int_to_ptr.vmem [resolvable:$true] %s50
      %56 = dma.hbm_to_vmem [thread:$0]  %s2, 512, %s51, [#allocation6], 128, 128, 8
    $region13: #{bert_last_self_attention.2} parent=1 // pred_fallthru
      _
    // Predicated region
    $region14: #{bert_last_self_attention.2} parent=1 // pred_check
      _
    $region15: #{bert_last_self_attention.2} parent=1 // pred_check_branch
      %58 = sbr.rel (0) target = $region17
    $region16: #{bert_last_self_attention.2} parent=1 // pred_region
      %s60 = ssub.s32 512, 512
      %61 = vsyncadd [#allocation9], %s60
      %s62 = sshll.u32 [#allocation8], 4
      %s63 = int_to_ptr.vmem [resolvable:$true] %s62
      %68 = dma.hbm_to_vmem [thread:$0]  %s3, 512, %s63, [#allocation9], 128, 128, 8
    $region17: #{bert_last_self_attention.2} parent=1 // pred_fallthru
      _
    // Predicated region
    $region18: #{bert_last_self_attention.2} parent=1 // pred_check
      _
    $region19: #{bert_last_self_attention.2} parent=1 // pred_check_branch
      %70 = sbr.rel (0) target = $region21
    $region20: #{bert_last_self_attention.2} parent=1 // pred_region
      %s72 = ssub.s32 16, 16
      %73 = vsyncadd [#allocation9], %s72
      %s75 = sshll.u32 [#allocation10], 4
      %s76 = int_to_ptr.vmem [resolvable:$true] %s75
      %78 = dma.hbm_to_vmem [thread:$0]  %s4, 16, %s76, [#allocation9]
    $region21: #{bert_last_self_attention.2} parent=1 // pred_fallthru
      _
    // Predicated region
    $region22: #{bert_last_self_attention.2} parent=1 // pred_check
      _
    $region23: #{bert_last_self_attention.2} parent=1 // pred_check_branch
      %80 = sbr.rel (0) target = $region25
    $region24: #{bert_last_self_attention.2} parent=1 // pred_region
      %s82 = ssub.s32 16, 16
      %83 = vsyncadd [#allocation12], %s82
      %s85 = sshll.u32 [#allocation11], 4
      %s86 = int_to_ptr.vmem [resolvable:$true] %s85
      %88 = dma.hbm_to_vmem [thread:$0]  %s5, 16, %s86, [#allocation12]
    $region25: #{bert_last_self_attention.2} parent=1 // pred_fallthru
      _
    // Predicated region
    $region26: #{bert_last_self_attention.2} parent=1 // pred_check
      _
    $region27: #{bert_last_self_attention.2} parent=1 // pred_check_branch
      %90 = sbr.rel (0) target = $region29
    $region28: #{bert_last_self_attention.2} parent=1 // pred_region
      %s92 = ssub.s32 16, 16
      %93 = vsyncadd [#allocation12], %s92
      %s95 = sshll.u32 [#allocation13], 4
      %s96 = int_to_ptr.vmem [resolvable:$true] %s95
      %98 = dma.hbm_to_vmem [thread:$0]  %s6, 16, %s96, [#allocation12]
    $region29: #{bert_last_self_attention.2} parent=1 // pred_fallthru
      _
    // Predicated region
    $region30: #{bert_last_self_attention.2} parent=1 // pred_check
      _
    $region31: #{bert_last_self_attention.2} parent=1 // pred_check_branch
      %100 = sbr.rel (0) target = $region33
    $region32: #{bert_last_self_attention.2} parent=1 // pred_region
      %101 = dma.done [#allocation3], 256
    $region33: #{bert_last_self_attention.2} parent=1 // pred_fallthru
      _
    // Predicated region
    $region34: #{bert_last_self_attention.2} parent=1 // pred_check
      _
    $region35: #{bert_last_self_attention.2} parent=1 // pred_check_branch
      %103 = sbr.rel (0) target = $region37
    $region36: #{bert_last_self_attention.2} parent=1 // pred_region
      %104 = dma.done [#allocation6], 512
    $region37: #{bert_last_self_attention.2} parent=1 // pred_fallthru
      _
    // Predicated region
    $region38: #{bert_last_self_attention.2} parent=1 // pred_check
      _
    $region39: #{bert_last_self_attention.2} parent=1 // pred_check_branch
      %106 = sbr.rel (0) target = $region41
    $region40: #{bert_last_self_attention.2} parent=1 // pred_region
      %107 = dma.done [#allocation6], 512
    $region41: #{bert_last_self_attention.2} parent=1 // pred_fallthru
      _
    // Predicated region
    $region42: #{bert_last_self_attention.2} parent=1 // pred_check
      _
    $region43: #{bert_last_self_attention.2} parent=1 // pred_check_branch
      %109 = sbr.rel (0) target = $region45
    $region44: #{bert_last_self_attention.2} parent=1 // pred_region
      %110 = dma.done [#allocation9], 512
    $region45: #{bert_last_self_attention.2} parent=1 // pred_fallthru
      _
    // Predicated region
    $region46: #{bert_last_self_attention.2} parent=1 // pred_check
      _
    $region47: #{bert_last_self_attention.2} parent=1 // pred_check_branch
      %112 = sbr.rel (0) target = $region49
    $region48: #{bert_last_self_attention.2} parent=1 // pred_region
      %113 = dma.done [#allocation9], 16
    $region49: #{bert_last_self_attention.2} parent=1 // pred_fallthru
      _
    // Predicated region
    $region50: #{bert_last_self_attention.2} parent=1 // pred_check
      _
    $region51: #{bert_last_self_attention.2} parent=1 // pred_check_branch
      %115 = sbr.rel (0) target = $region53
    $region52: #{bert_last_self_attention.2} parent=1 // pred_region
      %116 = dma.done [#allocation12], 16
    $region53: #{bert_last_self_attention.2} parent=1 // pred_fallthru
      _
    // Predicated region
    $region54: #{bert_last_self_attention.2} parent=1 // pred_check
      _
    $region55: #{bert_last_self_attention.2} parent=1 // pred_check_branch
      %118 = sbr.rel (0) target = $region57
    $region56: #{bert_last_self_attention.2} parent=1 // pred_region
      %119 = dma.done [#allocation12], 16
    $region57: #{bert_last_self_attention.2} parent=1 // pred_fallthru
      _
    %v120 = vld [vmem:[#allocation2] sm:$0xff]
    %v121 = vld [vmem:[#allocation2 + $0x8] sm:$0xff]
    %v122 = vld [vmem:[#allocation5] sm:$0xff]
    %v123 = vld [vmem:[#allocation5 + $0x8] sm:$0xff]
    %v124 = vld [vmem:[#allocation5 + $0x10] sm:$0xff]
    %v125 = vld [vmem:[#allocation5 + $0x18] sm:$0xff]
    %v126 = vld [vmem:[#allocation10] sm:$0x1]
    %v128 = vlaneseq
    %v129 = vshrl.u32 %v128, 7
    %v130 = vsub.s32 0, %v129
    %v131 = vrot.slane %v126, %v130
    %vm133 = vcmask 261120
    %v135 = vsel %vm133, %v120, 0
    %v138 = vsel %vm133, %v121, 0
    %140 = vmatprep.subr.mxu0 0.0
    %141 = vmatpush1.msra.mxu0 %v122
    %142 = vmatprep.subr.mxu0 0.0
    %143 = vmatpush1.msra.mxu0 %v123
    %144 = vmatprep.subr.mxu0 0.0
    %145 = vmatpush1.msra.mxu0 %v124
    %146 = vmatprep.subr.mxu0 0.0
    %147 = vmatpush1.msra.mxu0 %v125
    %148 = vmatprep.subr.mxu0 0.0
    %149 = vmatpush1.msra.mxu0 0.0
    %150 = vmatprep.subr.mxu0 0.0
    %151 = vmatpush1.msra.mxu0 0.0
    %152 = vmatprep.subr.mxu0 0.0
    %153 = vmatpush1.msra.mxu0 0.0
    %154 = vmatprep.subr.mxu0 0.0
    %155 = vmatpush1.msra.mxu0 0.0
    %156 = vmatprep.subr.mxu0 0.0
    %157 = vmatpush1.msra.mxu0 0.0
    %158 = vmatprep.subr.mxu0 0.0
    %159 = vmatpush1.msra.mxu0 0.0
    %160 = vmatprep.subr.mxu0 0.0
    %161 = vmatpush1.msra.mxu0 0.0
    %162 = vmatprep.subr.mxu0 0.0
    %163 = vmatpush1.msra.mxu0 0.0
    %164 = vmatprep.subr.mxu0 0.0
    %165 = vmatpush1.msra.mxu0 0.0
    %166 = vmatprep.subr.mxu0 0.0
    %167 = vmatpush1.msra.mxu0 0.0
    %168 = vmatprep.subr.mxu0 0.0
    %169 = vmatpush1.msra.mxu0 0.0
    %170 = vmatprep.subr.mxu0 0.0
    %171 = vmatpush1.msra.mxu0 0.0
    %172 = vmatprep.subr.mxu0 0.0
    %173 = vmatpush1.msra.mxu0 0.0
    %174 = vmatprep.subr.mxu0 0.0
    %175 = vmatpush1.msra.mxu0 0.0
    %176 = vmatprep.subr.mxu0 0.0
    %177 = vmatpush1.msra.mxu0 0.0
    %178 = vmatprep.subr.mxu0 0.0
    %179 = vmatpush1.msra.mxu0 0.0
    %180 = vmatprep.subr.mxu0 0.0
    %181 = vmatpush1.msra.mxu0 0.0
    %182 = vmatprep.subr.mxu0 0.0
    %183 = vmatpush1.msra.mxu0 0.0
    %184 = vmatprep.subr.mxu0 0.0
    %185 = vmatpush1.msra.mxu0 0.0
    %186 = vmatprep.subr.mxu0 0.0
    %187 = vmatpush1.msra.mxu0 0.0
    %188 = vmatprep.subr.mxu0 0.0
    %189 = vmatpush1.msra.mxu0 0.0
    %190 = vmatprep.subr.mxu0 0.0
    %191 = vmatpush1.msra.mxu0 0.0
    %192 = vmatprep.subr.mxu0 0.0
    %193 = vmatpush1.msra.mxu0 0.0
    %194 = vmatprep.subr.mxu0 0.0
    %195 = vmatpush1.msra.mxu0 0.0
    %196 = vmatprep.subr.mxu0 0.0
    %197 = vmatpush1.msra.mxu0 0.0
    %198 = vmatprep.subr.mxu0 0.0
    %199 = vmatpush1.msra.mxu0 0.0
    %200 = vmatprep.subr.mxu0 0.0
    %201 = vmatpush1.msra.mxu0 0.0
    %202 = vmatprep.subr.mxu0 0.0
    %203 = vmatpush1.msra.mxu0 0.0
    %204 = vmatprep.mubr.f32.mxu0 0.0
    %205 = vmatmul.mubr.f32.gmra.mrb[0].mxu0 %v135
    %v206 = vpop.f32.mrb[0].mxu0
    %v207 = vadd.f32 %v131, %v206
    %v208 = vpop.f32.mrb[0].mxu0
    %209 = vmatprep.mubr.f32.mxu0 0.0
    %210 = vmatmul.mubr.f32.gmra.mrb[0].mxu0 %v138
    %v211 = vpop.f32.mrb[0].mxu0
    %v212 = vadd.f32 %v131, %v211
    %v213 = vpop.f32.mrb[0].mxu0
    %214 = vdwg.mxu0
    %215 = vst.msk [vmem:[#allocation14] sm:$0xff] %vm133, %v207
    %216 = vst.msk [vmem:[#allocation14 + $0x8] sm:$0xff] %vm133, %v212
    %v217 = vld [vmem:[#allocation7] sm:$0xff]
    %v218 = vld [vmem:[#allocation7 + $0x8] sm:$0xff]
    %v219 = vld [vmem:[#allocation7 + $0x10] sm:$0xff]
    %v220 = vld [vmem:[#allocation7 + $0x18] sm:$0xff]
    %v221 = vld [vmem:[#allocation11] sm:$0x1]
    %v223 = vlaneseq
    %v224 = vshrl.u32 %v223, 7
    %v225 = vsub.s32 0, %v224
    %v226 = vrot.slane %v221, %v225
    %228 = vmatprep.subr.mxu0 0.0
    %229 = vmatpush1.msra.mxu0 %v217
    %230 = vmatprep.subr.mxu0 0.0
    %231 = vmatpush1.msra.mxu0 %v218
    %232 = vmatprep.subr.mxu0 0.0
    %233 = vmatpush1.msra.mxu0 %v219
    %234 = vmatprep.subr.mxu0 0.0
    %235 = vmatpush1.msra.mxu0 %v220
    %236 = vmatprep.subr.mxu0 0.0
    %237 = vmatpush1.msra.mxu0 0.0
    %238 = vmatprep.subr.mxu0 0.0
    %239 = vmatpush1.msra.mxu0 0.0
    %240 = vmatprep.subr.mxu0 0.0
    %241 = vmatpush1.msra.mxu0 0.0
    %242 = vmatprep.subr.mxu0 0.0
    %243 = vmatpush1.msra.mxu0 0.0
    %244 = vmatprep.subr.mxu0 0.0
    %245 = vmatpush1.msra.mxu0 0.0
    %246 = vmatprep.subr.mxu0 0.0
    %247 = vmatpush1.msra.mxu0 0.0
    %248 = vmatprep.subr.mxu0 0.0
    %249 = vmatpush1.msra.mxu0 0.0
    %250 = vmatprep.subr.mxu0 0.0
    %251 = vmatpush1.msra.mxu0 0.0
    %252 = vmatprep.subr.mxu0 0.0
    %253 = vmatpush1.msra.mxu0 0.0
    %254 = vmatprep.subr.mxu0 0.0
    %255 = vmatpush1.msra.mxu0 0.0
    %256 = vmatprep.subr.mxu0 0.0
    %257 = vmatpush1.msra.mxu0 0.0
    %258 = vmatprep.subr.mxu0 0.0
    %259 = vmatpush1.msra.mxu0 0.0
    %260 = vmatprep.subr.mxu0 0.0
    %261 = vmatpush1.msra.mxu0 0.0
    %262 = vmatprep.subr.mxu0 0.0
    %263 = vmatpush1.msra.mxu0 0.0
    %264 = vmatprep.subr.mxu0 0.0
    %265 = vmatpush1.msra.mxu0 0.0
    %266 = vmatprep.subr.mxu0 0.0
    %267 = vmatpush1.msra.mxu0 0.0
    %268 = vmatprep.subr.mxu0 0.0
    %269 = vmatpush1.msra.mxu0 0.0
    %270 = vmatprep.subr.mxu0 0.0
    %271 = vmatpush1.msra.mxu0 0.0
    %272 = vmatprep.subr.mxu0 0.0
    %273 = vmatpush1.msra.mxu0 0.0
    %274 = vmatprep.subr.mxu0 0.0
    %275 = vmatpush1.msra.mxu0 0.0
    %276 = vmatprep.subr.mxu0 0.0
    %277 = vmatpush1.msra.mxu0 0.0
    %278 = vmatprep.subr.mxu0 0.0
    %279 = vmatpush1.msra.mxu0 0.0
    %280 = vmatprep.subr.mxu0 0.0
    %281 = vmatpush1.msra.mxu0 0.0
    %282 = vmatprep.subr.mxu0 0.0
    %283 = vmatpush1.msra.mxu0 0.0
    %284 = vmatprep.subr.mxu0 0.0
    %285 = vmatpush1.msra.mxu0 0.0
    %286 = vmatprep.subr.mxu0 0.0
    %287 = vmatpush1.msra.mxu0 0.0
    %288 = vmatprep.subr.mxu0 0.0
    %289 = vmatpush1.msra.mxu0 0.0
    %290 = vmatprep.subr.mxu0 0.0
    %291 = vmatpush1.msra.mxu0 0.0
    %292 = vmatprep.mubr.f32.mxu0 0.0
    %293 = vmatmul.mubr.f32.gmra.mrb[0].mxu0 %v135
    %v294 = vpop.f32.mrb[0].mxu0
    %v295 = vadd.f32 %v226, %v294
    %v296 = vpop.f32.mrb[0].mxu0
    %297 = vmatprep.mubr.f32.mxu0 0.0
    %298 = vmatmul.mubr.f32.gmra.mrb[0].mxu0 %v138
    %v299 = vpop.f32.mrb[0].mxu0
    %v300 = vadd.f32 %v226, %v299
    %v301 = vpop.f32.mrb[0].mxu0
    %302 = vdwg.mxu0
    %303 = vst.msk [vmem:[#allocation15] sm:$0xff] %vm133, %v295
    %304 = vst.msk [vmem:[#allocation15 + $0x8] sm:$0xff] %vm133, %v300
    %v305 = vld [vmem:[#allocation8] sm:$0xff]
    %v306 = vld [vmem:[#allocation8 + $0x8] sm:$0xff]
    %v307 = vld [vmem:[#allocation8 + $0x10] sm:$0xff]
    %v308 = vld [vmem:[#allocation8 + $0x18] sm:$0xff]
    %v309 = vld [vmem:[#allocation13] sm:$0x1]
    %v311 = vlaneseq
    %v312 = vshrl.u32 %v311, 7
    %v313 = vsub.s32 0, %v312
    %v314 = vrot.slane %v309, %v313
    %316 = vmatprep.subr.mxu0 0.0
    %317 = vmatpush1.msra.mxu0 %v305
    %318 = vmatprep.subr.mxu0 0.0
    %319 = vmatpush1.msra.mxu0 %v306
    %320 = vmatprep.subr.mxu0 0.0
    %321 = vmatpush1.msra.mxu0 %v307
    %322 = vmatprep.subr.mxu0 0.0
    %323 = vmatpush1.msra.mxu0 %v308
    %324 = vmatprep.subr.mxu0 0.0
    %325 = vmatpush1.msra.mxu0 0.0
    %326 = vmatprep.subr.mxu0 0.0
    %327 = vmatpush1.msra.mxu0 0.0
    %328 = vmatprep.subr.mxu0 0.0
    %329 = vmatpush1.msra.mxu0 0.0
    %330 = vmatprep.subr.mxu0 0.0
    %331 = vmatpush1.msra.mxu0 0.0
    %332 = vmatprep.subr.mxu0 0.0
    %333 = vmatpush1.msra.mxu0 0.0
    %334 = vmatprep.subr.mxu0 0.0
    %335 = vmatpush1.msra.mxu0 0.0
    %336 = vmatprep.subr.mxu0 0.0
    %337 = vmatpush1.msra.mxu0 0.0
    %338 = vmatprep.subr.mxu0 0.0
    %339 = vmatpush1.msra.mxu0 0.0
    %340 = vmatprep.subr.mxu0 0.0
    %341 = vmatpush1.msra.mxu0 0.0
    %342 = vmatprep.subr.mxu0 0.0
    %343 = vmatpush1.msra.mxu0 0.0
    %344 = vmatprep.subr.mxu0 0.0
    %345 = vmatpush1.msra.mxu0 0.0
    %346 = vmatprep.subr.mxu0 0.0
    %347 = vmatpush1.msra.mxu0 0.0
    %348 = vmatprep.subr.mxu0 0.0
    %349 = vmatpush1.msra.mxu0 0.0
    %350 = vmatprep.subr.mxu0 0.0
    %351 = vmatpush1.msra.mxu0 0.0
    %352 = vmatprep.subr.mxu0 0.0
    %353 = vmatpush1.msra.mxu0 0.0
    %354 = vmatprep.subr.mxu0 0.0
    %355 = vmatpush1.msra.mxu0 0.0
    %356 = vmatprep.subr.mxu0 0.0
    %357 = vmatpush1.msra.mxu0 0.0
    %358 = vmatprep.subr.mxu0 0.0
    %359 = vmatpush1.msra.mxu0 0.0
    %360 = vmatprep.subr.mxu0 0.0
    %361 = vmatpush1.msra.mxu0 0.0
    %362 = vmatprep.subr.mxu0 0.0
    %363 = vmatpush1.msra.mxu0 0.0
    %364 = vmatprep.subr.mxu0 0.0
    %365 = vmatpush1.msra.mxu0 0.0
    %366 = vmatprep.subr.mxu0 0.0
    %367 = vmatpush1.msra.mxu0 0.0
    %368 = vmatprep.subr.mxu0 0.0
    %369 = vmatpush1.msra.mxu0 0.0
    %370 = vmatprep.subr.mxu0 0.0
    %371 = vmatpush1.msra.mxu0 0.0
    %372 = vmatprep.subr.mxu0 0.0
    %373 = vmatpush1.msra.mxu0 0.0
    %374 = vmatprep.subr.mxu0 0.0
    %375 = vmatpush1.msra.mxu0 0.0
    %376 = vmatprep.subr.mxu0 0.0
    %377 = vmatpush1.msra.mxu0 0.0
    %378 = vmatprep.subr.mxu0 0.0
    %379 = vmatpush1.msra.mxu0 0.0
    %380 = vmatprep.mubr.f32.mxu0 0.0
    %381 = vmatmul.mubr.f32.gmra.mrb[0].mxu0 %v135
    %v382 = vpop.f32.mrb[0].mxu0
    %v383 = vadd.f32 %v314, %v382
    %v384 = vpop.f32.mrb[0].mxu0
    %385 = vmatprep.mubr.f32.mxu0 0.0
    %386 = vmatmul.mubr.f32.gmra.mrb[0].mxu0 %v138
    %v387 = vpop.f32.mrb[0].mxu0
    %v388 = vadd.f32 %v314, %v387
    %v389 = vpop.f32.mrb[0].mxu0
    %390 = vdwg.mxu0
    %391 = vst.msk [vmem:[#allocation17] sm:$0xff] %vm133, %v383
    %392 = vst.msk [vmem:[#allocation17 + $0x8] sm:$0xff] %vm133, %v388
    // Predicated region
    $region58: #{bert_last_self_attention.2} parent=1 // pred_check
      _
    $region59: #{bert_last_self_attention.2} parent=1 // pred_check_branch
      %394 = sbr.rel (0) target = $region61
    $region60: #{bert_last_self_attention.2} parent=1 // pred_region
      %s396 = ssub.s32 256, 256
      %397 = vsyncadd [#allocation4], %s396
      %s398 = sshll.u32 [#allocation14], 4
      %s399 = int_to_ptr.vmem [resolvable:$true] %s398
      %404 = dma.vmem_to_hbm [thread:$0]  %s399, 256, %s7, [#allocation4], 128, 128, 8
    $region61: #{bert_last_self_attention.2} parent=1 // pred_fallthru
      _
    // Predicated region
    $region62: #{bert_last_self_attention.2} parent=1 // pred_check
      _
    $region63: #{bert_last_self_attention.2} parent=1 // pred_check_branch
      %406 = sbr.rel (0) target = $region65
    $region64: #{bert_last_self_attention.2} parent=1 // pred_region
      %s408 = ssub.s32 256, 256
      %409 = vsyncadd [#allocation16], %s408
      %s410 = sshll.u32 [#allocation15], 4
      %s411 = int_to_ptr.vmem [resolvable:$true] %s410
      %416 = dma.vmem_to_hbm [thread:$0]  %s411, 256, %s8, [#allocation16], 128, 128, 8
    $region65: #{bert_last_self_attention.2} parent=1 // pred_fallthru
      _
    // Predicated region
    $region66: #{bert_last_self_attention.2} parent=1 // pred_check
      _
    $region67: #{bert_last_self_attention.2} parent=1 // pred_check_branch
      %418 = sbr.rel (0) target = $region69
    $region68: #{bert_last_self_attention.2} parent=1 // pred_region
      %s420 = ssub.s32 256, 256
      %421 = vsyncadd [#allocation16], %s420
      %s422 = sshll.u32 [#allocation17], 4
      %s423 = int_to_ptr.vmem [resolvable:$true] %s422
      %428 = dma.vmem_to_hbm [thread:$0]  %s423, 256, %s9, [#allocation16], 128, 128, 8
    $region69: #{bert_last_self_attention.2} parent=1 // pred_fallthru
      _
    // Predicated region
    $region70: #{bert_last_self_attention.2} parent=1 // pred_check
      _
    $region71: #{bert_last_self_attention.2} parent=1 // pred_check_branch
      %430 = sbr.rel (0) target = $region73
    $region72: #{bert_last_self_attention.2} parent=1 // pred_region
      %431 = dma.done [#allocation4], 256
    $region73: #{bert_last_self_attention.2} parent=1 // pred_fallthru
      _
    // Predicated region
    $region74: #{bert_last_self_attention.2} parent=1 // pred_check
      _
    $region75: #{bert_last_self_attention.2} parent=1 // pred_check_branch
      %433 = sbr.rel (0) target = $region77
    $region76: #{bert_last_self_attention.2} parent=1 // pred_region
      %434 = dma.done [#allocation16], 256
    $region77: #{bert_last_self_attention.2} parent=1 // pred_fallthru
      _
    // Predicated region
    $region78: #{bert_last_self_attention.2} parent=1 // pred_check
      _
    $region79: #{bert_last_self_attention.2} parent=1 // pred_check_branch
      %436 = sbr.rel (0) target = $region81
    $region80: #{bert_last_self_attention.2} parent=1 // pred_region
      %437 = dma.done [#allocation16], 256
    $region81: #{bert_last_self_attention.2} parent=1 // pred_fallthru
      _
    %438 = vsyncpa [#allocation3], 1
    %439 = vsyncpa [#allocation6], 1
    %440 = vsyncpa [#allocation9], 1
    %441 = vsyncpa [#allocation12], 1
    %442 = vsyncpa [#allocation4], 1
    %443 = vsyncpa [#allocation16], 1

// kernel: bert_last_self_attention.3
$region0: #{bert_last_self_attention.3}
  #allocation0 [shape = 'u32[]', space=smem, size = 0x4, offset = 0x4, fixed_abs, tag = 'smem constant byte address 0x4 - core index']
  #allocation1 [shape = 'u32[144,128]{1,0:T(1,128)}', space=vmem, size = 0x12000, scoped, tag = 'internal scratch']
  #allocation2 [shape = 'f32[8,1]{1,0:T(8,128)}', space=vmem, size = 0x1000, scoped, tag = 'scratch operand']
  #allocation3 [shape = 'f32[8,1]{1,0:T(8,128)}', space=vmem, size = 0x1000, scoped, tag = 'scratch operand']
  #allocation4 [shape = 'f32[8,8]{1,0:T(8,128)}', space=vmem, size = 0x1000, scoped, tag = 'scratch operand']
  %s0 = inlined_call_operand.hbm [shape: f32[8,8,8], index: 0, kind: input, shape index: {}]
  %s1 = inlined_call_operand.hbm [shape: f32[8,8,8], index: 1, kind: input, shape index: {}]
  %s2 = inlined_call_operand.hbm [shape: f32[8,8,8], index: 2, kind: input, shape index: {}]
  %s3 = inlined_call_operand.hbm [shape: f32[8,1,8], index: 3, kind: input, shape index: {}]
  %s4 = inlined_call_operand.hbm [shape: f32[8,8,8], index: 4, kind: output, shape index: {}]
  %s5 = sld [smem:[#allocation0]]
  $region73: #{bert_last_self_attention.3} parent=0
    _
  %s7 = ssub.s32 1, %s5
  %s8 = scalar_select 0, %s7, %s5
  $region1: #{bert_last_self_attention.3} parent=0
    #allocation5 [shape = 'u8[8192]{0}', space=vmem, size = 0x2000, scoped, tag = 'input window, operand 0']
    #allocation6 [shape = 's32[2]{0}', space=sflag, size = 0x8, scoped, tag = 'scoped memory for bert_last_self_attention.3']
    #allocation7 [shape = 's32[2]{0}', space=sflag, size = 0x8, scoped, tag = 'scoped memory for bert_last_self_attention.3']
    #allocation8 [shape = 'u8[8192]{0}', space=vmem, size = 0x2000, scoped, tag = 'input window, operand 1']
    #allocation9 [shape = 's32[2]{0}', space=sflag, size = 0x8, scoped, tag = 'scoped memory for bert_last_self_attention.3']
    #allocation10 [shape = 'u8[8192]{0}', space=vmem, size = 0x2000, scoped, tag = 'input window, operand 2']
    #allocation11 [shape = 'u8[1024]{0}', space=vmem, size = 0x400, scoped, tag = 'input window, operand 3']
    #allocation12 [shape = 's32[2]{0}', space=sflag, size = 0x8, scoped, tag = 'scoped memory for bert_last_self_attention.3']
    #allocation13 [shape = 'u8[8192]{0}', space=vmem, size = 0x2000, scoped, tag = 'output window, operand 0']
    %9 = vsyncpa [#allocation6], 0
    %s10 = scalar_lea.sflag [#allocation6], 1
    %11 = vsyncpa %s10, 0
    %12 = vsyncpa [#allocation9], 0
    %s13 = scalar_lea.sflag [#allocation9], 1
    %14 = vsyncpa %s13, 0
    %15 = vsyncpa [#allocation12], 0
    %s16 = scalar_lea.sflag [#allocation12], 1
    %17 = vsyncpa %s16, 0
    %18 = vsyncpa [#allocation7], 0
    %s19 = scalar_lea.sflag [#allocation7], 1
    %20 = vsyncpa %s19, 0
    loop: start=0, step=1, limit=10
    $region2: #{bert_last_self_attention.3} parent=1 // loop_pre_header
      _
    $region3: #{bert_last_self_attention.3} parent=1 // loop_header
      %s22 = sphi 0, %s26
      %p23 = scmp.ge.s32.totalorder %s22, 10
      %s29 = sphi 0, %s48
      %s30 = sphi 0, %s44
      %s31 = sphi 0, %s40
      %s32 = sphi 0, %s29
      %s33 = sphi 0, %s30
      %s34 = sphi 0, %s31
      %s35 = sphi 0, %s32
      %s36 = sphi 0, %s33
      %s37 = sphi 0, %s34
      %s53 = sphi 0, %s55
      %s56 = sphi 0, %s53
      %s57 = sphi 0, %s56
      %s73 = sphi 0, %s57
      %s81 = sphi 0, %s83
      %s84 = sphi 0, %s81
      %s85 = sphi 0, %s84
      %s101 = sphi 0, %s85
      %s109 = sphi 0, %s111
      %s112 = sphi 0, %s109
      %s113 = sphi 0, %s112
      %s129 = sphi 0, %s113
      %s137 = sphi 0, %s139
      %s140 = sphi 0, %s137
      %s141 = sphi 0, %s140
      %s157 = sphi 0, %s141
      %s165 = sphi 0, %s167
      %s168 = sphi 0, %s165
      %s169 = sphi 0, %s168
      %s185 = sphi 0, %s169
    $region4: #{bert_last_self_attention.3} parent=1 // loop_header_branch
      %25 = sbr.rel (%p23) target = $region8
    $region5: #{bert_last_self_attention.3} parent=1 // loop_body
      %s27 = ssub.s32 %s22, 1
      %s28 = ssub.s32 %s22, 2
      %s38 = sadd.s32 1, %s31
      %p39 = scmp.ge.s32.totalorder %s38, 1
      %s40 = scalar_select %p39, 0, %s38
      %s41 = sadd.s32 1, %s30
      %s42 = scalar_select %p39, %s41, %s30
      %p43 = scmp.ge.s32.totalorder %s42, 1
      %s44 = scalar_select %p43, 0, %s42
      %s45 = sadd.s32 1, %s29
      %s46 = scalar_select %p43, %s45, %s29
      %p47 = scmp.ge.s32.totalorder %s46, 8
      %s48 = scalar_select %p47, 0, %s46
      %s49 = ssub.s32 %s29, %s48
      %s50 = ssub.s32 %s30, %s44
      %s51 = sor.u32 %s49, %s50
      %p52 = scmp.eq.s32.totalorder %s51, 0
      %s54 = sadd.s32 %s53, 1
      %s55 = scalar_select %p52, %s53, %s54
      %p58 = pneg %p52
      %p59 = scmp.eq.s32.totalorder %s22, 7
      %p60 = por %p58, %p59
      %p61 = scmp.ne.s32.totalorder %s53, %s56
      %p62 = scmp.eq.s32.totalorder %s22, 0
      %p63 = por %p61, %p62
      %p64 = scmp.ne.s32.totalorder %s53, %s56
      %p65 = scmp.eq.s32.totalorder %s27, 7
      %p66 = por %p64, %p65
      %p67 = scmp.ne.s32.totalorder %s56, %s57
      %p68 = scmp.eq.s32.totalorder %s27, 0
      %p69 = por %p67, %p68
      %p70 = scmp.ne.s32.totalorder %s56, %s57
      %p71 = scmp.eq.s32.totalorder %s28, 7
      %p72 = por %p70, %p71
      %p74 = scmp.ne.s32.totalorder %s57, %s73
      %p75 = scmp.eq.s32.totalorder %s28, 0
      %p76 = por %p74, %p75
      %s77 = ssub.s32 %s29, %s48
      %s78 = ssub.s32 %s31, %s40
      %s79 = sor.u32 %s77, %s78
      %p80 = scmp.eq.s32.totalorder %s79, 0
      %s82 = sadd.s32 %s81, 1
      %s83 = scalar_select %p80, %s81, %s82
      %p86 = pneg %p80
      %p87 = scmp.eq.s32.totalorder %s22, 7
      %p88 = por %p86, %p87
      %p89 = scmp.ne.s32.totalorder %s81, %s84
      %p90 = scmp.eq.s32.totalorder %s22, 0
      %p91 = por %p89, %p90
      %p92 = scmp.ne.s32.totalorder %s81, %s84
      %p93 = scmp.eq.s32.totalorder %s27, 7
      %p94 = por %p92, %p93
      %p95 = scmp.ne.s32.totalorder %s84, %s85
      %p96 = scmp.eq.s32.totalorder %s27, 0
      %p97 = por %p95, %p96
      %p98 = scmp.ne.s32.totalorder %s84, %s85
      %p99 = scmp.eq.s32.totalorder %s28, 7
      %p100 = por %p98, %p99
      %p102 = scmp.ne.s32.totalorder %s85, %s101
      %p103 = scmp.eq.s32.totalorder %s28, 0
      %p104 = por %p102, %p103
      %s105 = ssub.s32 %s29, %s48
      %s106 = ssub.s32 %s31, %s40
      %s107 = sor.u32 %s105, %s106
      %p108 = scmp.eq.s32.totalorder %s107, 0
      %s110 = sadd.s32 %s109, 1
      %s111 = scalar_select %p108, %s109, %s110
      %p114 = pneg %p108
      %p115 = scmp.eq.s32.totalorder %s22, 7
      %p116 = por %p114, %p115
      %p117 = scmp.ne.s32.totalorder %s109, %s112
      %p118 = scmp.eq.s32.totalorder %s22, 0
      %p119 = por %p117, %p118
      %p120 = scmp.ne.s32.totalorder %s109, %s112
      %p121 = scmp.eq.s32.totalorder %s27, 7
      %p122 = por %p120, %p121
      %p123 = scmp.ne.s32.totalorder %s112, %s113
      %p124 = scmp.eq.s32.totalorder %s27, 0
      %p125 = por %p123, %p124
      %p126 = scmp.ne.s32.totalorder %s112, %s113
      %p127 = scmp.eq.s32.totalorder %s28, 7
      %p128 = por %p126, %p127
      %p130 = scmp.ne.s32.totalorder %s113, %s129
      %p131 = scmp.eq.s32.totalorder %s28, 0
      %p132 = por %p130, %p131
      %s133 = ssub.s32 %s29, %s48
      %s134 = ssub.s32 %s31, %s40
      %s135 = sor.u32 %s133, %s134
      %p136 = scmp.eq.s32.totalorder %s135, 0
      %s138 = sadd.s32 %s137, 1
      %s139 = scalar_select %p136, %s137, %s138
      %p142 = pneg %p136
      %p143 = scmp.eq.s32.totalorder %s22, 7
      %p144 = por %p142, %p143
      %p145 = scmp.ne.s32.totalorder %s137, %s140
      %p146 = scmp.eq.s32.totalorder %s22, 0
      %p147 = por %p145, %p146
      %p148 = scmp.ne.s32.totalorder %s137, %s140
      %p149 = scmp.eq.s32.totalorder %s27, 7
      %p150 = por %p148, %p149
      %p151 = scmp.ne.s32.totalorder %s140, %s141
      %p152 = scmp.eq.s32.totalorder %s27, 0
      %p153 = por %p151, %p152
      %p154 = scmp.ne.s32.totalorder %s140, %s141
      %p155 = scmp.eq.s32.totalorder %s28, 7
      %p156 = por %p154, %p155
      %p158 = scmp.ne.s32.totalorder %s141, %s157
      %p159 = scmp.eq.s32.totalorder %s28, 0
      %p160 = por %p158, %p159
      %s161 = ssub.s32 %s29, %s48
      %s162 = ssub.s32 %s30, %s44
      %s163 = sor.u32 %s161, %s162
      %p164 = scmp.eq.s32.totalorder %s163, 0
      %s166 = sadd.s32 %s165, 1
      %s167 = scalar_select %p164, %s165, %s166
      %p170 = pneg %p164
      %p171 = scmp.eq.s32.totalorder %s22, 7
      %p172 = por %p170, %p171
      %p173 = scmp.ne.s32.totalorder %s165, %s168
      %p174 = scmp.eq.s32.totalorder %s22, 0
      %p175 = por %p173, %p174
      %p176 = scmp.ne.s32.totalorder %s165, %s168
      %p177 = scmp.eq.s32.totalorder %s27, 7
      %p178 = por %p176, %p177
      %p179 = scmp.ne.s32.totalorder %s168, %s169
      %p180 = scmp.eq.s32.totalorder %s27, 0
      %p181 = por %p179, %p180
      %p182 = scmp.ne.s32.totalorder %s168, %s169
      %p183 = scmp.eq.s32.totalorder %s28, 7
      %p184 = por %p182, %p183
      %p186 = scmp.ne.s32.totalorder %s169, %s185
      %p187 = scmp.eq.s32.totalorder %s28, 0
      %p188 = por %p186, %p187
      %p189 = scmp.le.s32.totalorder 1, %s22
      %p190 = scmp.lt.s32.totalorder %s22, 9
      %p191 = pnand %p189, %p190
      %p192 = pneg %p191
      // Predicated region
      $region9: #{bert_last_self_attention.3} parent=5 // pred_check
        _
      $region10: #{bert_last_self_attention.3} parent=5 // pred_check_branch
        %194 = sbr.rel (%p191) target = $region12
      $region11: #{bert_last_self_attention.3} parent=5 // pred_region
        %s195 = ssub.s32 %s22, 1
      $region12: #{bert_last_self_attention.3} parent=5 // pred_fallthru
        _
      %p196 = scmp.lt.s32.totalorder %s22, 8
      // Predicated region
      $region13: #{bert_last_self_attention.3} parent=5 // pred_check
        %p197 = pneg %p196
      $region14: #{bert_last_self_attention.3} parent=5 // pred_check_branch
        %199 = sbr.rel (%p197) target = $region16
      $region15: #{bert_last_self_attention.3} parent=5 // pred_region
        // Predicated region
        $region17: #{bert_last_self_attention.3} parent=15 // pred_check
          %p200 = pneg %p63
        $region18: #{bert_last_self_attention.3} parent=15 // pred_check_branch
          %202 = sbr.rel (%p200) target = $region20
        $region19: #{bert_last_self_attention.3} parent=15 // pred_region
          %s203 = sand.u32 %s53, 1
          %s204 = scalar_lea.sflag [#allocation6], %s203
          %s205 = sand.u32 %s53, 1
          %s206 = smul.addr %s205, 8
          %s207 = scalar_lea.vmem [#allocation5], %s206
          %s209 = ssub.s32 128, 128
          %210 = vsyncadd %s204, %s209
          %s211 = sadd.s32 %s30, %s29
          %s212 = smul.addr %s211, 128
          %s213 = scalar_lea.hbm %s0, %s212
          %s215 = sshll.u32 %s207, 4
          %s216 = int_to_ptr.vmem [resolvable:$true] %s215
          %218 = dma.hbm_to_vmem [thread:$0]  %s213, 128, %s216, %s204
        $region20: #{bert_last_self_attention.3} parent=15 // pred_fallthru
          _
        // Predicated region
        $region21: #{bert_last_self_attention.3} parent=15 // pred_check
          %p219 = pneg %p91
        $region22: #{bert_last_self_attention.3} parent=15 // pred_check_branch
          %221 = sbr.rel (%p219) target = $region24
        $region23: #{bert_last_self_attention.3} parent=15 // pred_region
          %s222 = sand.u32 %s22, 1
          %s223 = scalar_lea.sflag [#allocation9], %s222
          %s224 = sand.u32 %s81, 1
          %s225 = smul.addr %s224, 8
          %s226 = scalar_lea.vmem [#allocation8], %s225
          %s228 = ssub.s32 128, 128
          %229 = vsyncadd %s223, %s228
          %s230 = sadd.s32 %s31, %s29
          %s231 = smul.addr %s230, 128
          %s232 = scalar_lea.hbm %s1, %s231
          %s234 = sshll.u32 %s226, 4
          %s235 = int_to_ptr.vmem [resolvable:$true] %s234
          %237 = dma.hbm_to_vmem [thread:$0]  %s232, 128, %s235, %s223
        $region24: #{bert_last_self_attention.3} parent=15 // pred_fallthru
          _
        // Predicated region
        $region25: #{bert_last_self_attention.3} parent=15 // pred_check
          %p238 = pneg %p119
        $region26: #{bert_last_self_attention.3} parent=15 // pred_check_branch
          %240 = sbr.rel (%p238) target = $region28
        $region27: #{bert_last_self_attention.3} parent=15 // pred_region
          %s241 = sand.u32 %s22, 1
          %s242 = scalar_lea.sflag [#allocation9], %s241
          %s243 = sand.u32 %s109, 1
          %s244 = smul.addr %s243, 8
          %s245 = scalar_lea.vmem [#allocation10], %s244
          %s247 = ssub.s32 128, 128
          %248 = vsyncadd %s242, %s247
          %s249 = sadd.s32 %s31, %s29
          %s250 = smul.addr %s249, 128
          %s251 = scalar_lea.hbm %s2, %s250
          %s253 = sshll.u32 %s245, 4
          %s254 = int_to_ptr.vmem [resolvable:$true] %s253
          %256 = dma.hbm_to_vmem [thread:$0]  %s251, 128, %s254, %s242
        $region28: #{bert_last_self_attention.3} parent=15 // pred_fallthru
          _
        // Predicated region
        $region29: #{bert_last_self_attention.3} parent=15 // pred_check
          %p257 = pneg %p147
        $region30: #{bert_last_self_attention.3} parent=15 // pred_check_branch
          %259 = sbr.rel (%p257) target = $region32
        $region31: #{bert_last_self_attention.3} parent=15 // pred_region
          %s260 = sand.u32 %s137, 1
          %s261 = scalar_lea.sflag [#allocation12], %s260
          %s262 = sand.u32 %s137, 1
          %s263 = scalar_lea.vmem [#allocation11], %s262
          %s265 = ssub.s32 16, 16
          %266 = vsyncadd %s261, %s265
          %s267 = sadd.s32 %s31, %s29
          %s268 = smul.addr %s267, 16
          %s269 = scalar_lea.hbm %s3, %s268
          %s271 = sshll.u32 %s263, 4
          %s272 = int_to_ptr.vmem [resolvable:$true] %s271
          %274 = dma.hbm_to_vmem [thread:$0]  %s269, 16, %s272, %s261
        $region32: #{bert_last_self_attention.3} parent=15 // pred_fallthru
          _
      $region16: #{bert_last_self_attention.3} parent=5 // pred_fallthru
        _
      %p275 = scmp.le.s32.totalorder 1, %s22
      %p276 = scmp.lt.s32.totalorder %s22, 9
      %p277 = pnand %p275, %p276
      %p278 = pneg %p277
      // Predicated region
      $region33: #{bert_last_self_attention.3} parent=5 // pred_check
        _
      $region34: #{bert_last_self_attention.3} parent=5 // pred_check_branch
        %280 = sbr.rel (%p277) target = $region36
      $region35: #{bert_last_self_attention.3} parent=5 // pred_region
        %s281 = ssub.s32 %s22, 1
        %s282 = sand.u32 %s56, 1
        %s283 = scalar_lea.sflag [#allocation6], %s282
        %s284 = sand.u32 %s56, 1
        %s285 = smul.addr %s284, 8
        %s286 = scalar_lea.vmem [#allocation5], %s285
        // Predicated region
        $region37: #{bert_last_self_attention.3} parent=35 // pred_check
          %p287 = pneg %p69
        $region38: #{bert_last_self_attention.3} parent=35 // pred_check_branch
          %289 = sbr.rel (%p287) target = $region40
        $region39: #{bert_last_self_attention.3} parent=35 // pred_region
          %290 = dma.done %s283, 128
        $region40: #{bert_last_self_attention.3} parent=35 // pred_fallthru
          _
        %s291 = sand.u32 %s27, 1
        %s292 = scalar_lea.sflag [#allocation9], %s291
        %s293 = sand.u32 %s84, 1
        %s294 = smul.addr %s293, 8
        %s295 = scalar_lea.vmem [#allocation8], %s294
        // Predicated region
        $region41: #{bert_last_self_attention.3} parent=35 // pred_check
          %p296 = pneg %p97
        $region42: #{bert_last_self_attention.3} parent=35 // pred_check_branch
          %298 = sbr.rel (%p296) target = $region44
        $region43: #{bert_last_self_attention.3} parent=35 // pred_region
          %299 = dma.done %s292, 128
        $region44: #{bert_last_self_attention.3} parent=35 // pred_fallthru
          _
        %s300 = sand.u32 %s27, 1
        %s301 = scalar_lea.sflag [#allocation9], %s300
        %s302 = sand.u32 %s112, 1
        %s303 = smul.addr %s302, 8
        %s304 = scalar_lea.vmem [#allocation10], %s303
        // Predicated region
        $region45: #{bert_last_self_attention.3} parent=35 // pred_check
          %p305 = pneg %p125
        $region46: #{bert_last_self_attention.3} parent=35 // pred_check_branch
          %307 = sbr.rel (%p305) target = $region48
        $region47: #{bert_last_self_attention.3} parent=35 // pred_region
          %308 = dma.done %s301, 128
        $region48: #{bert_last_self_attention.3} parent=35 // pred_fallthru
          _
        %s309 = sand.u32 %s140, 1
        %s310 = scalar_lea.sflag [#allocation12], %s309
        %s311 = sand.u32 %s140, 1
        %s312 = scalar_lea.vmem [#allocation11], %s311
        // Predicated region
        $region49: #{bert_last_self_attention.3} parent=35 // pred_check
          %p313 = pneg %p153
        $region50: #{bert_last_self_attention.3} parent=35 // pred_check_branch
          %315 = sbr.rel (%p313) target = $region52
        $region51: #{bert_last_self_attention.3} parent=35 // pred_region
          %316 = dma.done %s310, 16
        $region52: #{bert_last_self_attention.3} parent=35 // pred_fallthru
          _
        %s317 = sand.u32 %s56, 1
        %s318 = scalar_lea.sflag [#allocation6], %s317
        %s319 = sand.u32 %s56, 1
        %s320 = smul.addr %s319, 8
        %s321 = scalar_lea.vmem [#allocation5], %s320
        %p322 = pneg %p69
        %p323 = pneg %p66
        %s324 = sand.u32 %s27, 1
        %s325 = scalar_lea.sflag [#allocation9], %s324
        %s326 = sand.u32 %s84, 1
        %s327 = smul.addr %s326, 8
        %s328 = scalar_lea.vmem [#allocation8], %s327
        %p329 = pneg %p97
        %p330 = pneg %p94
        %s331 = sand.u32 %s27, 1
        %s332 = scalar_lea.sflag [#allocation9], %s331
        %s333 = sand.u32 %s112, 1
        %s334 = smul.addr %s333, 8
        %s335 = scalar_lea.vmem [#allocation10], %s334
        %p336 = pneg %p125
        %p337 = pneg %p122
        %s338 = sand.u32 %s140, 1
        %s339 = scalar_lea.sflag [#allocation12], %s338
        %s340 = sand.u32 %s140, 1
        %s341 = scalar_lea.vmem [#allocation11], %s340
        %p342 = pneg %p153
        %p343 = pneg %p150
        %p344 = pneg %p181
        %p345 = pneg %p178
        %s346 = sand.u32 %s168, 1
        %s347 = scalar_lea.sflag [#allocation7], %s346
        %s348 = sand.u32 %s168, 1
        %s349 = smul.addr %s348, 8
        %s350 = scalar_lea.vmem [#allocation13], %s349
        %p351 = scmp.eq.s32.totalorder %s34, 0
        // Predicated region
        $region53: #{bert_last_self_attention.3} parent=35 // pred_check
          %p352 = pneg %p351
        $region54: #{bert_last_self_attention.3} parent=35 // pred_check_branch
          %354 = sbr.rel (%p352) target = $region56
        $region55: #{bert_last_self_attention.3} parent=35 // pred_region
          %vm355 = vcmask 7168
          %356 = vst.msk [vmem:[#allocation2] sm:$0xff] %vm355, -inf
          %357 = vst.msk [vmem:[#allocation3] sm:$0xff] %vm355, 0.0
          %vm358 = vcmask 64512
          %359 = vst.msk [vmem:[#allocation4] sm:$0xff] %vm358, 0.0
        $region56: #{bert_last_self_attention.3} parent=35 // pred_fallthru
          _
        %v360 = vld [vmem:[%s286] sm:$0xff]
        %v361 = vld [vmem:[%s295] sm:$0xff]
        %v362 = vld [vmem:[%s304] sm:$0xff]
        %vm363 = vcmask 64512
        %v365 = vsel %vm363, %v360, 0
        %v368 = vsel %vm363, %v361, 0
        %370 = vmatprep.subr.mxu0 0.0
        %371 = vmatpush1.xpose.msra.mxu0 %v368
        %372 = vmatprep.subr.mxu0 0.0
        %373 = vmatpush1.xpose.msra.mxu0 0.0
        %374 = vmatprep.subr.mxu0 0.0
        %375 = vmatpush1.xpose.msra.mxu0 0.0
        %376 = vmatprep.subr.mxu0 0.0
        %377 = vmatpush1.xpose.msra.mxu0 0.0
        %378 = vmatprep.subr.mxu0 0.0
        %379 = vmatpush1.xpose.msra.mxu0 0.0
        %380 = vmatprep.subr.mxu0 0.0
        %381 = vmatpush1.xpose.msra.mxu0 0.0
        %382 = vmatprep.subr.mxu0 0.0
        %383 = vmatpush1.xpose.msra.mxu0 0.0
        %384 = vmatprep.subr.mxu0 0.0
        %385 = vmatpush1.xpose.msra.mxu0 0.0
        %386 = vmatprep.subr.mxu0 0.0
        %387 = vmatpush1.xpose.msra.mxu0 0.0
        %388 = vmatprep.subr.mxu0 0.0
        %389 = vmatpush1.xpose.msra.mxu0 0.0
        %390 = vmatprep.subr.mxu0 0.0
        %391 = vmatpush1.xpose.msra.mxu0 0.0
        %392 = vmatprep.subr.mxu0 0.0
        %393 = vmatpush1.xpose.msra.mxu0 0.0
        %394 = vmatprep.subr.mxu0 0.0
        %395 = vmatpush1.xpose.msra.mxu0 0.0
        %396 = vmatprep.subr.mxu0 0.0
        %397 = vmatpush1.xpose.msra.mxu0 0.0
        %398 = vmatprep.subr.mxu0 0.0
        %399 = vmatpush1.xpose.msra.mxu0 0.0
        %400 = vmatprep.subr.mxu0 0.0
        %401 = vmatpush1.xpose.msra.mxu0 0.0
        %402 = vmatprep.subr.mxu0 0.0
        %403 = vmatpush1.xpose.msra.mxu0 0.0
        %404 = vmatprep.subr.mxu0 0.0
        %405 = vmatpush1.xpose.msra.mxu0 0.0
        %406 = vmatprep.subr.mxu0 0.0
        %407 = vmatpush1.xpose.msra.mxu0 0.0
        %408 = vmatprep.subr.mxu0 0.0
        %409 = vmatpush1.xpose.msra.mxu0 0.0
        %410 = vmatprep.subr.mxu0 0.0
        %411 = vmatpush1.xpose.msra.mxu0 0.0
        %412 = vmatprep.subr.mxu0 0.0
        %413 = vmatpush1.xpose.msra.mxu0 0.0
        %414 = vmatprep.subr.mxu0 0.0
        %415 = vmatpush1.xpose.msra.mxu0 0.0
        %416 = vmatprep.subr.mxu0 0.0
        %417 = vmatpush1.xpose.msra.mxu0 0.0
        %418 = vmatprep.subr.mxu0 0.0
        %419 = vmatpush1.xpose.msra.mxu0 0.0
        %420 = vmatprep.subr.mxu0 0.0
        %421 = vmatpush1.xpose.msra.mxu0 0.0
        %422 = vmatprep.subr.mxu0 0.0
        %423 = vmatpush1.xpose.msra.mxu0 0.0
        %424 = vmatprep.subr.mxu0 0.0
        %425 = vmatpush1.xpose.msra.mxu0 0.0
        %426 = vmatprep.subr.mxu0 0.0
        %427 = vmatpush1.xpose.msra.mxu0 0.0
        %428 = vmatprep.subr.mxu0 0.0
        %429 = vmatpush1.xpose.msra.mxu0 0.0
        %430 = vmatprep.subr.mxu0 0.0
        %431 = vmatpush1.xpose.msra.mxu0 0.0
        %432 = vmatprep.subr.mxu0 0.0
        %433 = vmatpush1.xpose.msra.mxu0 0.0
        %434 = vmatprep.mubr.f32.mxu0 0.0
        %435 = vmatmul.mubr.f32.gmra.mrb[0].mxu0 %v365
        %v436 = vpop.f32.mrb[0].mxu0
        %v437 = vadd.f32 0.0, %v436
        %v438 = vpop.f32.mrb[0].mxu0
        %439 = vdwg.mxu0
        %v440 = vmul.f32 %v437, 0.35355338
        %v441 = vld [vmem:[%s312] sm:$0x1]
        %v443 = vlaneseq
        %v444 = vshrl.u32 %v443, 7
        %v445 = vsub.s32 0, %v444
        %v446 = vrot.slane %v441, %v445
        %v448 = vadd.f32 %v440, %v446
        %v449 = vld [vmem:[#allocation2] sm:$0xff]
        %v450 = vsel %vm363, %v448, -inf
        %451 = vmax.xlane.f32.xlu0 %v450
        %v452 = vpop.xlane.xlu0 %451
        %v453 = vmax.f32 %v449, %v452
        %v454 = vsub.f32 %v449, %v453
        %v455 = vmul.f32 %v454, 1.442695
        %v456 = vpow.pop %v455
        %458 = vset.pattern.permute.xlu0 0
        %459 = vperm.xlu0 %458, %v453
        %v460 = vpop.permute.xlu0 %459
        %v462 = vsub.f32 %v448, %v460
        %v463 = vmul.f32 %v462, 1.442695
        %v464 = vpow.pop %v463
        %v465 = vld [vmem:[#allocation3] sm:$0xff]
        %v466 = vmul.f32 %v456, %v465
        %v467 = vsel %vm363, %v464, 0.0
        %468 = vadd.xlane.f32.xlu0 %v467
        %v469 = vpop.xlane.xlu0 %468
        %v470 = vadd.f32 %v466, %v469
        %vm471 = vcmask 7168
        %472 = vst.msk [vmem:[#allocation3] sm:$0xff] %vm471, %v470
        %v473 = vld [vmem:[#allocation4] sm:$0xff]
        %475 = vset.pattern.permute.xlu0 0
        %476 = vperm.xlu0 %475, %v456
        %v477 = vpop.permute.xlu0 %476
        %v479 = vmul.f32 %v477, %v473
        %v481 = vsel %vm363, %v464, 0
        %483 = vmatprep.subr.mxu0 0.0
        %484 = vmatpush1.msra.mxu0 %v362
        %485 = vmatprep.subr.mxu0 0.0
        %486 = vmatpush1.msra.mxu0 0.0
        %487 = vmatprep.subr.mxu0 0.0
        %488 = vmatpush1.msra.mxu0 0.0
        %489 = vmatprep.subr.mxu0 0.0
        %490 = vmatpush1.msra.mxu0 0.0
        %491 = vmatprep.subr.mxu0 0.0
        %492 = vmatpush1.msra.mxu0 0.0
        %493 = vmatprep.subr.mxu0 0.0
        %494 = vmatpush1.msra.mxu0 0.0
        %495 = vmatprep.subr.mxu0 0.0
        %496 = vmatpush1.msra.mxu0 0.0
        %497 = vmatprep.subr.mxu0 0.0
        %498 = vmatpush1.msra.mxu0 0.0
        %499 = vmatprep.subr.mxu0 0.0
        %500 = vmatpush1.msra.mxu0 0.0
        %501 = vmatprep.subr.mxu0 0.0
        %502 = vmatpush1.msra.mxu0 0.0
        %503 = vmatprep.subr.mxu0 0.0
        %504 = vmatpush1.msra.mxu0 0.0
        %505 = vmatprep.subr.mxu0 0.0
        %506 = vmatpush1.msra.mxu0 0.0
        %507 = vmatprep.subr.mxu0 0.0
        %508 = vmatpush1.msra.mxu0 0.0
        %509 = vmatprep.subr.mxu0 0.0
        %510 = vmatpush1.msra.mxu0 0.0
        %511 = vmatprep.subr.mxu0 0.0
        %512 = vmatpush1.msra.mxu0 0.0
        %513 = vmatprep.subr.mxu0 0.0
        %514 = vmatpush1.msra.mxu0 0.0
        %515 = vmatprep.subr.mxu0 0.0
        %516 = vmatpush1.msra.mxu0 0.0
        %517 = vmatprep.subr.mxu0 0.0
        %518 = vmatpush1.msra.mxu0 0.0
        %519 = vmatprep.subr.mxu0 0.0
        %520 = vmatpush1.msra.mxu0 0.0
        %521 = vmatprep.subr.mxu0 0.0
        %522 = vmatpush1.msra.mxu0 0.0
        %523 = vmatprep.subr.mxu0 0.0
        %524 = vmatpush1.msra.mxu0 0.0
        %525 = vmatprep.subr.mxu0 0.0
        %526 = vmatpush1.msra.mxu0 0.0
        %527 = vmatprep.subr.mxu0 0.0
        %528 = vmatpush1.msra.mxu0 0.0
        %529 = vmatprep.subr.mxu0 0.0
        %530 = vmatpush1.msra.mxu0 0.0
        %531 = vmatprep.subr.mxu0 0.0
        %532 = vmatpush1.msra.mxu0 0.0
        %533 = vmatprep.subr.mxu0 0.0
        %534 = vmatpush1.msra.mxu0 0.0
        %535 = vmatprep.subr.mxu0 0.0
        %536 = vmatpush1.msra.mxu0 0.0
        %537 = vmatprep.subr.mxu0 0.0
        %538 = vmatpush1.msra.mxu0 0.0
        %539 = vmatprep.subr.mxu0 0.0
        %540 = vmatpush1.msra.mxu0 0.0
        %541 = vmatprep.subr.mxu0 0.0
        %542 = vmatpush1.msra.mxu0 0.0
        %543 = vmatprep.subr.mxu0 0.0
        %544 = vmatpush1.msra.mxu0 0.0
        %545 = vmatprep.subr.mxu0 0.0
        %546 = vmatpush1.msra.mxu0 0.0
        %547 = vmatprep.mubr.f32.mxu0 0.0
        %548 = vmatmul.mubr.f32.gmra.mrb[0].mxu0 %v481
        %v549 = vpop.f32.mrb[0].mxu0
        %v550 = vadd.f32 0.0, %v549
        %v551 = vpop.f32.mrb[0].mxu0
        %552 = vdwg.mxu0
        %v553 = vadd.f32 %v479, %v550
        %554 = vst.msk [vmem:[#allocation4] sm:$0xff] %vm363, %v553
        %555 = vst.msk [vmem:[#allocation2] sm:$0xff] %vm471, %v453
        // Predicated region
        $region57: #{bert_last_self_attention.3} parent=35 // pred_check
          %p556 = pneg %p351
        $region58: #{bert_last_self_attention.3} parent=35 // pred_check_branch
          %558 = sbr.rel (%p556) target = $region60
        $region59: #{bert_last_self_attention.3} parent=35 // pred_region
          %v559 = vld [vmem:[#allocation4] sm:$0xff]
          %v560 = vld [vmem:[#allocation3] sm:$0xff]
          %562 = vset.pattern.permute.xlu0 0
          %563 = vperm.xlu0 %562, %v560
          %v564 = vpop.permute.xlu0 %563
          %v566 = vrcp.pop %v564
          %v567 = vmul.f32 %v559, %v566
          %568 = vst.msk [vmem:[%s350] sm:$0xff] %vm363, %v567
        $region60: #{bert_last_self_attention.3} parent=35 // pred_fallthru
          _
        %s569 = sand.u32 %s168, 1
        %s570 = scalar_lea.sflag [#allocation7], %s569
        %s571 = sand.u32 %s168, 1
        %s572 = smul.addr %s571, 8
        %s573 = scalar_lea.vmem [#allocation13], %s572
        // Predicated region
        $region61: #{bert_last_self_attention.3} parent=35 // pred_check
          %p574 = pneg %p178
        $region62: #{bert_last_self_attention.3} parent=35 // pred_check_branch
          %576 = sbr.rel (%p574) target = $region64
        $region63: #{bert_last_self_attention.3} parent=35 // pred_region
          %s578 = ssub.s32 128, 128
          %579 = vsyncadd %s570, %s578
          %s580 = sadd.s32 %s33, %s32
          %s581 = smul.addr %s580, 128
          %s582 = scalar_lea.hbm %s4, %s581
          %s584 = sshll.u32 %s573, 4
          %s585 = int_to_ptr.vmem [resolvable:$true] %s584
          %587 = dma.vmem_to_hbm [thread:$0]  %s585, 128, %s582, %s570
        $region64: #{bert_last_self_attention.3} parent=35 // pred_fallthru
          _
      $region36: #{bert_last_self_attention.3} parent=5 // pred_fallthru
        _
      %p588 = scmp.le.s32.totalorder 2, %s22
      // Predicated region
      $region65: #{bert_last_self_attention.3} parent=5 // pred_check
        %p589 = pneg %p588
      $region66: #{bert_last_self_attention.3} parent=5 // pred_check_branch
        %591 = sbr.rel (%p589) target = $region68
      $region67: #{bert_last_self_attention.3} parent=5 // pred_region
        %s592 = ssub.s32 %s22, 2
        // Predicated region
        $region69: #{bert_last_self_attention.3} parent=67 // pred_check
          %p593 = pneg %p184
        $region70: #{bert_last_self_attention.3} parent=67 // pred_check_branch
          %595 = sbr.rel (%p593) target = $region72
        $region71: #{bert_last_self_attention.3} parent=67 // pred_region
          %s596 = sand.u32 %s169, 1
          %s597 = scalar_lea.sflag [#allocation7], %s596
          %s598 = sand.u32 %s169, 1
          %s599 = smul.addr %s598, 8
          %s600 = scalar_lea.vmem [#allocation13], %s599
          %601 = dma.done %s597, 128
        $region72: #{bert_last_self_attention.3} parent=67 // pred_fallthru
          _
      $region68: #{bert_last_self_attention.3} parent=5 // pred_fallthru
        _
    $region6: #{bert_last_self_attention.3} parent=1 // loop_footer
      %s26 = sadd.s32 1, %s22
    $region7: #{bert_last_self_attention.3} parent=1 // loop_footer_branch
      %21 = sbr.rel target = $region3
    $region8: #{bert_last_self_attention.3} parent=1 // loop_exit
      _
    %602 = vsyncpa [#allocation6], 1
    %s603 = scalar_lea.sflag [#allocation6], 1
    %604 = vsyncpa %s603, 1
    %605 = vsyncpa [#allocation9], 1
    %s606 = scalar_lea.sflag [#allocation9], 1
    %607 = vsyncpa %s606, 1
    %608 = vsyncpa [#allocation12], 1
    %s609 = scalar_lea.sflag [#allocation12], 1
    %610 = vsyncpa %s609, 1
    %611 = vsyncpa [#allocation7], 1
    %s612 = scalar_lea.sflag [#allocation7], 1
    %613 = vsyncpa %s612, 1

</llo_original>
